<compile_context>
chip_gen: v7x
topology: tpu7x:2x2x1
jax: 0.10.0
libtpu: 0.0.40
codegen_flags: <defaults>
</compile_context>

<pallas_src>
import jax
import jax.numpy as jnp
from jax.experimental import pallas as pl
from jax.experimental.pallas import tpu as pltpu


def _disc_kernel(x_ref, att_ref, w1x_ref, w1a_ref, b1_ref, w2_ref, b2_ref,
                 out_ref, hid_ref):
    """One batch tile: fc1 (split-K, bf16 in / f32 acc) -> LeakyReLU(0.2) -> fc2."""
    # fc1: two MXU matmuls into the same f32 accumulator (no concat copy).
    z1 = jnp.dot(x_ref[...], w1x_ref[...], preferred_element_type=jnp.float32)
    z1 = z1 + jnp.dot(att_ref[...], w1a_ref[...],
                      preferred_element_type=jnp.float32)
    z1 = z1 + b1_ref[...]                          # (TM, ndh) + (1, ndh)
    hid = jnp.maximum(z1, 0.2 * z1)                # LeakyReLU(0.2): single VALU max
    hid_ref[...] = hid.astype(hid_ref.dtype)

    # fc2 (out_features == 1): VPU multiply + XLU lane reduction instead of an
    # N=1 MXU matmul; b2 is an SMEM scalar.
    z2 = jnp.sum(hid * w2_ref[...], axis=-1, keepdims=True) + b2_ref[0, 0]
    # Lane-dense store: broadcast the per-row scalar over 128 lanes; the
    # wrapper slices column 0 back out.
    out_ref[...] = jnp.broadcast_to(z2, out_ref.shape).astype(out_ref.dtype)


def _pick_tile_m(batch):
    # Largest convenient row tile that divides the batch (multiple of 8).
    for tm in (256, 128, 64, 32, 16, 8):
        if batch % tm == 0:
            return tm
    return batch  # single full-batch block (full-dim rule satisfies layout)


def discriminator_d1(x, att, w1, b1, w2, b2):
    """x:(B,resSize), att:(B,attSize), w1:(resSize+attSize,ndh), b1:(ndh,),
    w2:(ndh,1), b2:(1,).  Returns (out:(B,1), hidden:(B,ndh))."""
    B, res = x.shape
    _, attd = att.shape
    ndh = w1.shape[1]

    tm = _pick_tile_m(B)
    nb = B // tm

    # bf16 operands for the dominant fc1 stream; f32 accumulation in-kernel.
    x_b = x.astype(jnp.bfloat16)
    att_b = att.astype(jnp.bfloat16)
    w1x = w1[:res].astype(jnp.bfloat16)            # (res,  ndh)
    w1a = w1[res:].astype(jnp.bfloat16)            # (attd, ndh)
    b1_row = b1.reshape(1, ndh).astype(jnp.float32)
    w2_row = w2.reshape(1, ndh).astype(jnp.float32)
    b2_s = b2.reshape(1, 1).astype(jnp.float32)    # SMEM scalar

    # VMEM budget: double-buffered activation/output tiles + resident weights.
    est = (2 * tm * (res + attd) * 2               # x/att tiles (bf16, 2 bufs)
           + 2 * (res + attd) * ndh * 2            # W1 halves (bf16, worst case 2x)
           + 2 * ndh * 4 + 2 * ndh * 4             # b1 row + w2 row
           + 2 * tm * ndh * 4 + 2 * tm * 128 * 4   # hidden + out slab (2 bufs)
           + (2 << 20))                            # slack
    vmem_limit = min(max(est, 16 * 1024 * 1024), 48 * 1024 * 1024)
    # TODO(synk): for very large ndh (W1 no longer VMEM-resident, esp. v7x 64 MiB)
    # also tile the ndh axis with an extra grid dimension.

    out_slab, hidden = pl.pallas_call(
        _disc_kernel,
        grid=(nb,),
        out_shape=(
            jax.ShapeDtypeStruct((B, 128), jnp.float32),   # lane-dense fc2 slab
            jax.ShapeDtypeStruct((B, ndh), jnp.float32),   # hidden activations
        ),
        in_specs=[
            pl.BlockSpec((tm, res), lambda i: (i, 0)),
            pl.BlockSpec((tm, attd), lambda i: (i, 0)),
            pl.BlockSpec((res, ndh), lambda i: (0, 0)),    # resident W1[:res]
            pl.BlockSpec((attd, ndh), lambda i: (0, 0)),   # resident W1[res:]
            pl.BlockSpec((1, ndh), lambda i: (0, 0)),      # b1 row
            pl.BlockSpec((1, ndh), lambda i: (0, 0)),      # w2 row
            pl.BlockSpec(memory_space=pltpu.MemorySpace.SMEM),  # b2 scalar
        ],
        out_specs=(
            pl.BlockSpec((tm, 128), lambda i: (i, 0)),
            pl.BlockSpec((tm, ndh), lambda i: (i, 0)),
        ),
        compiler_params=pltpu.CompilerParams(
            dimension_semantics=("parallel",),
            vmem_limit_bytes=vmem_limit,
        ),
    )(x_b, att_b, w1x, w1a, b1_row, w2_row, b2_s)

    return out_slab[:, :1], hidden


def init_params(key, res_size, att_size, ndh):
    # weights_init: Linear weights ~ N(0, 0.02), biases = 0.
    k1, k2 = jax.random.split(key)
    d_in = res_size + att_size
    w1 = 0.02 * jax.random.normal(k1, (d_in, ndh), dtype=jnp.float32)
    b1 = jnp.zeros((ndh,), dtype=jnp.float32)
    w2 = 0.02 * jax.random.normal(k2, (ndh, 1), dtype=jnp.float32)
    b2 = jnp.zeros((1,), dtype=jnp.float32)
    return w1, b1, w2, b2


if __name__ == "__main__":
    key = jax.random.PRNGKey(0)
    kx, katt, kp = jax.random.split(key, 3)

    # Small shapes consistent with the module (opt.resSize, opt.attSize, opt.ndh);
    # B=512 so the batch grid (TM=256, 2 steps) is actually exercised.
    B, res_size, att_size, ndh = 512, 64, 32, 256

    x = jax.random.normal(kx, (B, res_size), dtype=jnp.float32)
    att = jax.random.normal(katt, (B, att_size), dtype=jnp.float32)
    w1, b1, w2, b2 = init_params(kp, res_size, att_size, ndh)

    out, hidden = discriminator_d1(x, att, w1, b1, w2, b2)
    jax.block_until_ready((out, hidden))

    # Reference in plain JAX with the same bf16 input quantization / f32 accumulate.
    xb = x.astype(jnp.bfloat16).astype(jnp.float32)
    attb = att.astype(jnp.bfloat16).astype(jnp.float32)
    w1b = w1.astype(jnp.bfloat16).astype(jnp.float32)
    z1_ref = xb @ w1b[:res_size] + attb @ w1b[res_size:] + b1
    hid_ref = jnp.maximum(z1_ref, 0.2 * z1_ref)
    out_ref = jnp.sum(hid_ref * w2.reshape(1, ndh), axis=-1, keepdims=True) + b2

    assert out.shape == (B, 1) and hidden.shape == (B, ndh)
    assert jnp.allclose(hidden, hid_ref, atol=2e-3, rtol=2e-3)
    assert jnp.allclose(out, out_ref, atol=2e-3, rtol=2e-3)

    print("KERNEL_OK")
</pallas_src>

<mosaic_0001>
module attributes {stable_mosaic.version = 11 : i64} {
  func.func @_disc_kernel(%arg0: i32, %arg1: memref<256x64xbf16, #tpu.memory_space<vmem>>, %arg2: memref<256x32xbf16, #tpu.memory_space<vmem>>, %arg3: memref<64x256xbf16, #tpu.memory_space<vmem>>, %arg4: memref<32x256xbf16, #tpu.memory_space<vmem>>, %arg5: memref<1x256xf32, #tpu.memory_space<vmem>>, %arg6: memref<1x256xf32, #tpu.memory_space<vmem>>, %arg7: memref<1x1xf32, #tpu.memory_space<smem>>, %arg8: memref<256x128xf32, #tpu.memory_space<vmem>>, %arg9: memref<256x256xf32, #tpu.memory_space<vmem>>) attributes {dimension_semantics = [#tpu.dimension_semantics<parallel>], iteration_bounds = array<i64: 2>, scalar_prefetch = 0 : i64, scratch_operands = 0 : i64, tpu.core_type = #tpu.core_type<tc>, window_params = [{transform_indices = @transform_0, window_bounds = array<i64: 256, 64>}, {transform_indices = @transform_1, window_bounds = array<i64: 256, 32>}, {pipeline_mode = #tpu.pipeline_mode<synchronous>, transform_indices = @transform_2, window_bounds = array<i64: 64, 256>}, {pipeline_mode = #tpu.pipeline_mode<synchronous>, transform_indices = @transform_3, window_bounds = array<i64: 32, 256>}, {pipeline_mode = #tpu.pipeline_mode<synchronous>, transform_indices = @transform_4, window_bounds = array<i64: 1, 256>}, {pipeline_mode = #tpu.pipeline_mode<synchronous>, transform_indices = @transform_5, window_bounds = array<i64: 1, 256>}, {transform_indices = @transform_6, window_bounds = array<i64: 1, 1>}, {transform_indices = @transform_7, window_bounds = array<i64: 256, 128>}, {transform_indices = @transform_8, window_bounds = array<i64: 256, 256>}]} {
    %c0 = arith.constant 0 : index
    %c0_0 = arith.constant 0 : index
    %0 = vector.load %arg1[%c0, %c0_0] : memref<256x64xbf16, #tpu.memory_space<vmem>>, vector<256x64xbf16>
    %c0_1 = arith.constant 0 : index
    %c0_2 = arith.constant 0 : index
    %1 = vector.load %arg3[%c0_1, %c0_2] : memref<64x256xbf16, #tpu.memory_space<vmem>>, vector<64x256xbf16>
    %cst = arith.constant dense<0.000000e+00> : vector<256x256xf32>
    %2 = tpu.matmul %0, %1, %cst {dimension_numbers = #tpu.dot_dimension_numbers<[1], [0], [0], [1], [0, 0, 1, 1], [], []>} : vector<256x64xbf16>, vector<64x256xbf16>, vector<256x256xf32> -> vector<256x256xf32>
    %c0_3 = arith.constant 0 : index
    %c0_4 = arith.constant 0 : index
    %3 = vector.load %arg2[%c0_3, %c0_4] : memref<256x32xbf16, #tpu.memory_space<vmem>>, vector<256x32xbf16>
    %c0_5 = arith.constant 0 : index
    %c0_6 = arith.constant 0 : index
    %4 = vector.load %arg4[%c0_5, %c0_6] : memref<32x256xbf16, #tpu.memory_space<vmem>>, vector<32x256xbf16>
    %cst_7 = arith.constant dense<0.000000e+00> : vector<256x256xf32>
    %5 = tpu.matmul %3, %4, %cst_7 {dimension_numbers = #tpu.dot_dimension_numbers<[1], [0], [0], [1], [0, 0, 1, 1], [], []>} : vector<256x32xbf16>, vector<32x256xbf16>, vector<256x256xf32> -> vector<256x256xf32>
    %6 = arith.addf %2, %5 : vector<256x256xf32>
    %c0_8 = arith.constant 0 : index
    %c0_9 = arith.constant 0 : index
    %7 = vector.load %arg5[%c0_8, %c0_9] : memref<1x256xf32, #tpu.memory_space<vmem>>, vector<1x256xf32>
    %8 = vector.broadcast %7 : vector<1x256xf32> to vector<256x256xf32>
    %9 = arith.addf %6, %8 : vector<256x256xf32>
    %cst_10 = arith.constant 2.000000e-01 : f32
    %10 = vector.broadcast %cst_10 : f32 to vector<256x256xf32>
    %11 = arith.mulf %10, %9 : vector<256x256xf32>
    %12 = arith.maximumf %9, %11 : vector<256x256xf32>
    %c0_11 = arith.constant 0 : index
    %c0_12 = arith.constant 0 : index
    %13 = vector.load %arg9[%c0_11, %c0_12] : memref<256x256xf32, #tpu.memory_space<vmem>>, vector<256x256xf32>
    tpu.vector_store %arg9[%c0_11, %c0_12], %12 {strides = array<i32>} : memref<256x256xf32, #tpu.memory_space<vmem>>, vector<256x256xf32>,
    %c0_13 = arith.constant 0 : index
    %c0_14 = arith.constant 0 : index
    %14 = vector.load %arg6[%c0_13, %c0_14] : memref<1x256xf32, #tpu.memory_space<vmem>>, vector<1x256xf32>
    %15 = vector.broadcast %14 : vector<1x256xf32> to vector<256x256xf32>
    %16 = arith.mulf %12, %15 : vector<256x256xf32>
    %cst_15 = arith.constant dense<0.000000e+00> : vector<256xf32>
    %17 = vector.multi_reduction <add>, %16, %cst_15 [1] : vector<256x256xf32> to vector<256xf32>
    %18 = vector.shape_cast %17 : vector<256xf32> to vector<256x1xf32>
    %c0_16 = arith.constant 0 : index
    %c0_17 = arith.constant 0 : index
    %19 = memref.load %arg7[%c0_16, %c0_17] : memref<1x1xf32, #tpu.memory_space<smem>>
    %20 = vector.broadcast %19 : f32 to vector<256x1xf32>
    %21 = arith.addf %18, %20 : vector<256x1xf32>
    %22 = vector.shape_cast %21 : vector<256x1xf32> to vector<256x1xf32>
    %23 = vector.broadcast %22 : vector<256x1xf32> to vector<256x128xf32>
    %c0_18 = arith.constant 0 : index
    %c0_19 = arith.constant 0 : index
    %24 = vector.load %arg8[%c0_18, %c0_19] : memref<256x128xf32, #tpu.memory_space<vmem>>, vector<256x128xf32>
    tpu.vector_store %arg8[%c0_18, %c0_19], %23 {strides = array<i32>} : memref<256x128xf32, #tpu.memory_space<vmem>>, vector<256x128xf32>,
    return
  }
  func.func @transform_0(%arg0: i32) -> (i32, i32) {
    %c0_i32 = arith.constant 0 : i32
    %c0_i32_0 = arith.constant 0 : i32
    return %arg0, %c0_i32 : i32, i32
  }
  func.func @transform_1(%arg0: i32) -> (i32, i32) {
    %c0_i32 = arith.constant 0 : i32
    %c0_i32_0 = arith.constant 0 : i32
    return %arg0, %c0_i32 : i32, i32
  }
  func.func @transform_2(%arg0: i32) -> (i32, i32) {
    %c0_i32 = arith.constant 0 : i32
    %c0_i32_0 = arith.constant 0 : i32
    %c0_i32_1 = arith.constant 0 : i32
    return %c0_i32, %c0_i32_0 : i32, i32
  }
  func.func @transform_3(%arg0: i32) -> (i32, i32) {
    %c0_i32 = arith.constant 0 : i32
    %c0_i32_0 = arith.constant 0 : i32
    %c0_i32_1 = arith.constant 0 : i32
    return %c0_i32, %c0_i32_0 : i32, i32
  }
  func.func @transform_4(%arg0: i32) -> (i32, i32) {
    %c0_i32 = arith.constant 0 : i32
    %c0_i32_0 = arith.constant 0 : i32
    %c0_i32_1 = arith.constant 0 : i32
    return %c0_i32, %c0_i32_0 : i32, i32
  }
  func.func @transform_5(%arg0: i32) -> (i32, i32) {
    %c0_i32 = arith.constant 0 : i32
    %c0_i32_0 = arith.constant 0 : i32
    %c0_i32_1 = arith.constant 0 : i32
    return %c0_i32, %c0_i32_0 : i32, i32
  }
  func.func @transform_6(%arg0: i32) -> (i32, i32) {
    %c0_i32 = arith.constant 0 : i32
    %c0_i32_0 = arith.constant 0 : i32
    %c0_i32_1 = arith.constant 0 : i32
    return %c0_i32, %c0_i32_0 : i32, i32
  }
  func.func @transform_7(%arg0: i32) -> (i32, i32) {
    %c0_i32 = arith.constant 0 : i32
    %c0_i32_0 = arith.constant 0 : i32
    return %arg0, %c0_i32 : i32, i32
  }
  func.func @transform_8(%arg0: i32) -> (i32, i32) {
    %c0_i32 = arith.constant 0 : i32
    %c0_i32_0 = arith.constant 0 : i32
    return %arg0, %c0_i32 : i32, i32
  }
}

</mosaic_0001>

<llo_original>
// kernel: tpu_custom_call.1
$region0: #{tpu_custom_call.1}
  #allocation0 [shape = 'u32[]', space=smem, size = 0x4, offset = 0x4, fixed_abs, tag = 'smem constant byte address 0x4 - core index']
  #allocation1 [shape = 'u32[144,128]{1,0:T(1,128)}', space=vmem, size = 0x12000, scoped, tag = 'internal scratch']
  #allocation2 [shape = 'f32[1,1]{1,0:T(1,128)S(6)}', space=smem, size = 0x200, scoped, tag = 'scoped memory for tpu_custom_call.1']
  %s0 = inlined_call_operand.vmem [shape: bf16[512,64], index: 0, kind: input, shape index: {}]
  %s1 = inlined_call_operand.vmem [shape: bf16[512,32], index: 1, kind: input, shape index: {}]
  %s2 = inlined_call_operand.vmem [shape: bf16[64,256], index: 2, kind: input, shape index: {}]
  %s3 = inlined_call_operand.vmem [shape: bf16[32,256], index: 3, kind: input, shape index: {}]
  %s4 = inlined_call_operand.vmem [shape: f32[1,256], index: 4, kind: input, shape index: {}]
  %s5 = inlined_call_operand.vmem [shape: f32[1,256], index: 5, kind: input, shape index: {}]
  %s6 = inlined_call_operand.<no memory space> [shape: f32[1,1], index: 6, kind: input, shape index: {}]
  %s7 = inlined_call_operand.hbm [shape: f32[512,128], index: 7, kind: output, shape index: {0}]
  %s8 = inlined_call_operand.hbm [shape: f32[512,256], index: 8, kind: output, shape index: {1}]
  %9 = xla_tuple %s7, %s8
  %s10 = sld [smem:[#allocation0]]
  $region69: #{tpu_custom_call.1} parent=0
    _
  %s12 = ssub.s32 1, %s10
  %s13 = scalar_select 0, %s12, %s10
  %14 = sst [smem:[#allocation2]] %s6
  $region1: #{tpu_custom_call.1} parent=0
    #allocation3 [shape = 'u8[262144]{0}', space=vmem, size = 0x40000, scoped, tag = 'output window, operand 0']
    #allocation4 [shape = 's32[2]{0}', space=sflag, size = 0x8, scoped, tag = 'scoped memory for tpu_custom_call.1']
    #allocation5 [shape = 'u8[524288]{0}', space=vmem, size = 0x80000, scoped, tag = 'output window, operand 1']
    #allocation6 [shape = 's32[2]{0}', space=sflag, size = 0x8, scoped, tag = 'scoped memory for tpu_custom_call.1']
    %15 = vsyncpa [#allocation4], 0
    %s16 = scalar_lea.sflag [#allocation4], 1
    %17 = vsyncpa %s16, 0
    %18 = vsyncpa [#allocation6], 0
    %s19 = scalar_lea.sflag [#allocation6], 1
    %20 = vsyncpa %s19, 0
    loop: start=0, step=1, limit=4
    $region2: #{tpu_custom_call.1} parent=1 // loop_pre_header
      _
    $region3: #{tpu_custom_call.1} parent=1 // loop_header
      %s22 = sphi 0, %s26
      %p23 = scmp.ge.s32.totalorder %s22, 4
      %s32 = sphi 0, %s34
      %s35 = sphi 0, %s32
      %s36 = sphi 0, %s35
      %s52 = sphi 0, %s36
      %s58 = sphi 0, %s60
      %s61 = sphi 0, %s58
      %s62 = sphi 0, %s61
      %s78 = sphi 0, %s62
      %s82 = sphi 0, %s82
      %s84 = sphi 0, %s82
      %s85 = sphi 0, %s84
      %s99 = sphi 0, %s85
      %s103 = sphi 0, %s103
      %s105 = sphi 0, %s103
      %s106 = sphi 0, %s105
      %s120 = sphi 0, %s106
      %s124 = sphi 0, %s124
      %s126 = sphi 0, %s124
      %s127 = sphi 0, %s126
      %s141 = sphi 0, %s127
      %s145 = sphi 0, %s145
      %s147 = sphi 0, %s145
      %s148 = sphi 0, %s147
      %s162 = sphi 0, %s148
      %s166 = sphi 0, %s166
      %s168 = sphi 0, %s166
      %s169 = sphi 0, %s168
      %s183 = sphi 0, %s169
      %s189 = sphi 0, %s191
      %s192 = sphi 0, %s189
      %s193 = sphi 0, %s192
      %s209 = sphi 0, %s193
      %s215 = sphi 0, %s217
      %s218 = sphi 0, %s215
      %s219 = sphi 0, %s218
      %s235 = sphi 0, %s219
    $region4: #{tpu_custom_call.1} parent=1 // loop_header_branch
      %25 = sbr.rel (%p23) target = $region8
    $region5: #{tpu_custom_call.1} parent=1 // loop_body
      %s27 = ssub.s32 %s22, 1
      %s28 = ssub.s32 %s22, 2
      %s29 = sadd.s32 %s22, 1
      %s30 = ssub.s32 %s22, %s29
      %p31 = scmp.eq.s32.totalorder %s30, 0
      %s33 = sadd.s32 %s32, 1
      %s34 = scalar_select %p31, %s32, %s33
      %p37 = pneg %p31
      %p38 = scmp.eq.s32.totalorder %s22, 1
      %p39 = por %p37, %p38
      %p40 = scmp.ne.s32.totalorder %s32, %s35
      %p41 = scmp.eq.s32.totalorder %s22, 0
      %p42 = por %p40, %p41
      %p43 = scmp.ne.s32.totalorder %s32, %s35
      %p44 = scmp.eq.s32.totalorder %s27, 1
      %p45 = por %p43, %p44
      %p46 = scmp.ne.s32.totalorder %s35, %s36
      %p47 = scmp.eq.s32.totalorder %s27, 0
      %p48 = por %p46, %p47
      %p49 = scmp.ne.s32.totalorder %s35, %s36
      %p50 = scmp.eq.s32.totalorder %s28, 1
      %p51 = por %p49, %p50
      %p53 = scmp.ne.s32.totalorder %s36, %s52
      %p54 = scmp.eq.s32.totalorder %s28, 0
      %p55 = por %p53, %p54
      %s56 = ssub.s32 %s22, %s29
      %p57 = scmp.eq.s32.totalorder %s56, 0
      %s59 = sadd.s32 %s58, 1
      %s60 = scalar_select %p57, %s58, %s59
      %p63 = pneg %p57
      %p64 = scmp.eq.s32.totalorder %s22, 1
      %p65 = por %p63, %p64
      %p66 = scmp.ne.s32.totalorder %s58, %s61
      %p67 = scmp.eq.s32.totalorder %s22, 0
      %p68 = por %p66, %p67
      %p69 = scmp.ne.s32.totalorder %s58, %s61
      %p70 = scmp.eq.s32.totalorder %s27, 1
      %p71 = por %p69, %p70
      %p72 = scmp.ne.s32.totalorder %s61, %s62
      %p73 = scmp.eq.s32.totalorder %s27, 0
      %p74 = por %p72, %p73
      %p75 = scmp.ne.s32.totalorder %s61, %s62
      %p76 = scmp.eq.s32.totalorder %s28, 1
      %p77 = por %p75, %p76
      %p79 = scmp.ne.s32.totalorder %s62, %s78
      %p80 = scmp.eq.s32.totalorder %s28, 0
      %p81 = por %p79, %p80
      %s83 = sadd.s32 %s82, 1
      %p86 = scmp.eq.s32.totalorder %s22, 1
      %p87 = scmp.ne.s32.totalorder %s82, %s84
      %p88 = scmp.eq.s32.totalorder %s22, 0
      %p89 = por %p87, %p88
      %p90 = scmp.ne.s32.totalorder %s82, %s84
      %p91 = scmp.eq.s32.totalorder %s27, 1
      %p92 = por %p90, %p91
      %p93 = scmp.ne.s32.totalorder %s84, %s85
      %p94 = scmp.eq.s32.totalorder %s27, 0
      %p95 = por %p93, %p94
      %p96 = scmp.ne.s32.totalorder %s84, %s85
      %p97 = scmp.eq.s32.totalorder %s28, 1
      %p98 = por %p96, %p97
      %p100 = scmp.ne.s32.totalorder %s85, %s99
      %p101 = scmp.eq.s32.totalorder %s28, 0
      %p102 = por %p100, %p101
      %s104 = sadd.s32 %s103, 1
      %p107 = scmp.eq.s32.totalorder %s22, 1
      %p108 = scmp.ne.s32.totalorder %s103, %s105
      %p109 = scmp.eq.s32.totalorder %s22, 0
      %p110 = por %p108, %p109
      %p111 = scmp.ne.s32.totalorder %s103, %s105
      %p112 = scmp.eq.s32.totalorder %s27, 1
      %p113 = por %p111, %p112
      %p114 = scmp.ne.s32.totalorder %s105, %s106
      %p115 = scmp.eq.s32.totalorder %s27, 0
      %p116 = por %p114, %p115
      %p117 = scmp.ne.s32.totalorder %s105, %s106
      %p118 = scmp.eq.s32.totalorder %s28, 1
      %p119 = por %p117, %p118
      %p121 = scmp.ne.s32.totalorder %s106, %s120
      %p122 = scmp.eq.s32.totalorder %s28, 0
      %p123 = por %p121, %p122
      %s125 = sadd.s32 %s124, 1
      %p128 = scmp.eq.s32.totalorder %s22, 1
      %p129 = scmp.ne.s32.totalorder %s124, %s126
      %p130 = scmp.eq.s32.totalorder %s22, 0
      %p131 = por %p129, %p130
      %p132 = scmp.ne.s32.totalorder %s124, %s126
      %p133 = scmp.eq.s32.totalorder %s27, 1
      %p134 = por %p132, %p133
      %p135 = scmp.ne.s32.totalorder %s126, %s127
      %p136 = scmp.eq.s32.totalorder %s27, 0
      %p137 = por %p135, %p136
      %p138 = scmp.ne.s32.totalorder %s126, %s127
      %p139 = scmp.eq.s32.totalorder %s28, 1
      %p140 = por %p138, %p139
      %p142 = scmp.ne.s32.totalorder %s127, %s141
      %p143 = scmp.eq.s32.totalorder %s28, 0
      %p144 = por %p142, %p143
      %s146 = sadd.s32 %s145, 1
      %p149 = scmp.eq.s32.totalorder %s22, 1
      %p150 = scmp.ne.s32.totalorder %s145, %s147
      %p151 = scmp.eq.s32.totalorder %s22, 0
      %p152 = por %p150, %p151
      %p153 = scmp.ne.s32.totalorder %s145, %s147
      %p154 = scmp.eq.s32.totalorder %s27, 1
      %p155 = por %p153, %p154
      %p156 = scmp.ne.s32.totalorder %s147, %s148
      %p157 = scmp.eq.s32.totalorder %s27, 0
      %p158 = por %p156, %p157
      %p159 = scmp.ne.s32.totalorder %s147, %s148
      %p160 = scmp.eq.s32.totalorder %s28, 1
      %p161 = por %p159, %p160
      %p163 = scmp.ne.s32.totalorder %s148, %s162
      %p164 = scmp.eq.s32.totalorder %s28, 0
      %p165 = por %p163, %p164
      %s167 = sadd.s32 %s166, 1
      %p170 = scmp.eq.s32.totalorder %s22, 1
      %p171 = scmp.ne.s32.totalorder %s166, %s168
      %p172 = scmp.eq.s32.totalorder %s22, 0
      %p173 = por %p171, %p172
      %p174 = scmp.ne.s32.totalorder %s166, %s168
      %p175 = scmp.eq.s32.totalorder %s27, 1
      %p176 = por %p174, %p175
      %p177 = scmp.ne.s32.totalorder %s168, %s169
      %p178 = scmp.eq.s32.totalorder %s27, 0
      %p179 = por %p177, %p178
      %p180 = scmp.ne.s32.totalorder %s168, %s169
      %p181 = scmp.eq.s32.totalorder %s28, 1
      %p182 = por %p180, %p181
      %p184 = scmp.ne.s32.totalorder %s169, %s183
      %p185 = scmp.eq.s32.totalorder %s28, 0
      %p186 = por %p184, %p185
      %s187 = ssub.s32 %s22, %s29
      %p188 = scmp.eq.s32.totalorder %s187, 0
      %s190 = sadd.s32 %s189, 1
      %s191 = scalar_select %p188, %s189, %s190
      %p194 = pneg %p188
      %p195 = scmp.eq.s32.totalorder %s22, 1
      %p196 = por %p194, %p195
      %p197 = scmp.ne.s32.totalorder %s189, %s192
      %p198 = scmp.eq.s32.totalorder %s22, 0
      %p199 = por %p197, %p198
      %p200 = scmp.ne.s32.totalorder %s189, %s192
      %p201 = scmp.eq.s32.totalorder %s27, 1
      %p202 = por %p200, %p201
      %p203 = scmp.ne.s32.totalorder %s192, %s193
      %p204 = scmp.eq.s32.totalorder %s27, 0
      %p205 = por %p203, %p204
      %p206 = scmp.ne.s32.totalorder %s192, %s193
      %p207 = scmp.eq.s32.totalorder %s28, 1
      %p208 = por %p206, %p207
      %p210 = scmp.ne.s32.totalorder %s193, %s209
      %p211 = scmp.eq.s32.totalorder %s28, 0
      %p212 = por %p210, %p211
      %s213 = ssub.s32 %s22, %s29
      %p214 = scmp.eq.s32.totalorder %s213, 0
      %s216 = sadd.s32 %s215, 1
      %s217 = scalar_select %p214, %s215, %s216
      %p220 = pneg %p214
      %p221 = scmp.eq.s32.totalorder %s22, 1
      %p222 = por %p220, %p221
      %p223 = scmp.ne.s32.totalorder %s215, %s218
      %p224 = scmp.eq.s32.totalorder %s22, 0
      %p225 = por %p223, %p224
      %p226 = scmp.ne.s32.totalorder %s215, %s218
      %p227 = scmp.eq.s32.totalorder %s27, 1
      %p228 = por %p226, %p227
      %p229 = scmp.ne.s32.totalorder %s218, %s219
      %p230 = scmp.eq.s32.totalorder %s27, 0
      %p231 = por %p229, %p230
      %p232 = scmp.ne.s32.totalorder %s218, %s219
      %p233 = scmp.eq.s32.totalorder %s28, 1
      %p234 = por %p232, %p233
      %p236 = scmp.ne.s32.totalorder %s219, %s235
      %p237 = scmp.eq.s32.totalorder %s28, 0
      %p238 = por %p236, %p237
      %p239 = scmp.le.s32.totalorder 1, %s22
      %p240 = scmp.lt.s32.totalorder %s22, 3
      %p241 = pnand %p239, %p240
      %p242 = pneg %p241
      // Predicated region
      $region9: #{tpu_custom_call.1} parent=5 // pred_check
        _
      $region10: #{tpu_custom_call.1} parent=5 // pred_check_branch
        %244 = sbr.rel (%p241) target = $region12
      $region11: #{tpu_custom_call.1} parent=5 // pred_region
        %s245 = ssub.s32 %s22, 1
        // Predicated region
        $region13: #{tpu_custom_call.1} parent=11 // pred_check
          %p246 = pneg %p95
        $region14: #{tpu_custom_call.1} parent=11 // pred_check_branch
          %248 = sbr.rel (%p246) target = $region16
        $region15: #{tpu_custom_call.1} parent=11 // pred_region
          _
        $region16: #{tpu_custom_call.1} parent=11 // pred_fallthru
          _
        // Predicated region
        $region17: #{tpu_custom_call.1} parent=11 // pred_check
          %p249 = pneg %p116
        $region18: #{tpu_custom_call.1} parent=11 // pred_check_branch
          %251 = sbr.rel (%p249) target = $region20
        $region19: #{tpu_custom_call.1} parent=11 // pred_region
          _
        $region20: #{tpu_custom_call.1} parent=11 // pred_fallthru
          _
        // Predicated region
        $region21: #{tpu_custom_call.1} parent=11 // pred_check
          %p252 = pneg %p137
        $region22: #{tpu_custom_call.1} parent=11 // pred_check_branch
          %254 = sbr.rel (%p252) target = $region24
        $region23: #{tpu_custom_call.1} parent=11 // pred_region
          _
        $region24: #{tpu_custom_call.1} parent=11 // pred_fallthru
          _
        // Predicated region
        $region25: #{tpu_custom_call.1} parent=11 // pred_check
          %p255 = pneg %p158
        $region26: #{tpu_custom_call.1} parent=11 // pred_check_branch
          %257 = sbr.rel (%p255) target = $region28
        $region27: #{tpu_custom_call.1} parent=11 // pred_region
          _
        $region28: #{tpu_custom_call.1} parent=11 // pred_fallthru
          _
        // Predicated region
        $region29: #{tpu_custom_call.1} parent=11 // pred_check
          %p258 = pneg %p179
        $region30: #{tpu_custom_call.1} parent=11 // pred_check_branch
          %260 = sbr.rel (%p258) target = $region32
        $region31: #{tpu_custom_call.1} parent=11 // pred_region
          _
        $region32: #{tpu_custom_call.1} parent=11 // pred_fallthru
          _
      $region12: #{tpu_custom_call.1} parent=5 // pred_fallthru
        _
      %p261 = scmp.lt.s32.totalorder %s22, 2
      // Predicated region
      $region33: #{tpu_custom_call.1} parent=5 // pred_check
        %p262 = pneg %p261
      $region34: #{tpu_custom_call.1} parent=5 // pred_check_branch
        %264 = sbr.rel (%p262) target = $region36
      $region35: #{tpu_custom_call.1} parent=5 // pred_region
        // Predicated region
        $region37: #{tpu_custom_call.1} parent=35 // pred_check
          %p265 = pneg %p42
        $region38: #{tpu_custom_call.1} parent=35 // pred_check_branch
          %267 = sbr.rel (%p265) target = $region40
        $region39: #{tpu_custom_call.1} parent=35 // pred_region
          %s268 = smul.u32 32, %s22
          %p269 = scmp.lt.s32.totalorder %s268, 63
          %s270 = scalar_select %p269, %s268, 63
          %s271 = smul.addr %s270, 4
          %s272 = scalar_lea.vmem %s0, %s271
          %s273 = smul.u32 32, %s22
        $region40: #{tpu_custom_call.1} parent=35 // pred_fallthru
          _
        // Predicated region
        $region41: #{tpu_custom_call.1} parent=35 // pred_check
          %p274 = pneg %p68
        $region42: #{tpu_custom_call.1} parent=35 // pred_check_branch
          %276 = sbr.rel (%p274) target = $region44
        $region43: #{tpu_custom_call.1} parent=35 // pred_region
          %s277 = smul.u32 32, %s22
          %p278 = scmp.lt.s32.totalorder %s277, 63
          %s279 = scalar_select %p278, %s277, 63
          %s280 = smul.addr %s279, 4
          %s281 = scalar_lea.vmem %s1, %s280
          %s282 = smul.u32 32, %s22
        $region44: #{tpu_custom_call.1} parent=35 // pred_fallthru
          _
      $region36: #{tpu_custom_call.1} parent=5 // pred_fallthru
        _
      %p283 = scmp.le.s32.totalorder 1, %s22
      %p284 = scmp.lt.s32.totalorder %s22, 3
      %p285 = pnand %p283, %p284
      %p286 = pneg %p285
      // Predicated region
      $region45: #{tpu_custom_call.1} parent=5 // pred_check
        _
      $region46: #{tpu_custom_call.1} parent=5 // pred_check_branch
        %288 = sbr.rel (%p285) target = $region48
      $region47: #{tpu_custom_call.1} parent=5 // pred_region
        %s289 = ssub.s32 %s22, 1
        %s290 = smul.u32 32, %s27
        %p291 = scmp.lt.s32.totalorder %s290, 63
        %s292 = scalar_select %p291, %s290, 63
        %s293 = smul.addr %s292, 4
        %s294 = scalar_lea.vmem %s0, %s293
        %p295 = pneg %p48
        %p296 = pneg %p45
        %s297 = smul.u32 32, %s27
        %p298 = scmp.lt.s32.totalorder %s297, 63
        %s299 = scalar_select %p298, %s297, 63
        %s300 = smul.addr %s299, 4
        %s301 = scalar_lea.vmem %s1, %s300
        %p302 = pneg %p74
        %p303 = pneg %p71
        %p304 = pneg %p95
        %p305 = pneg %p92
        %p306 = pneg %p116
        %p307 = pneg %p113
        %p308 = pneg %p137
        %p309 = pneg %p134
        %p310 = pneg %p158
        %p311 = pneg %p155
        %p312 = pneg %p179
        %p313 = pneg %p176
        %p314 = pneg %p205
        %p315 = pneg %p202
        %s316 = sand.u32 %s192, 1
        %s317 = scalar_lea.sflag [#allocation4], %s316
        %s318 = sand.u32 %s192, 1
        %s319 = smul.addr %s318, 256
        %s320 = scalar_lea.vmem [#allocation3], %s319
        %p321 = pneg %p231
        %p322 = pneg %p228
        %s323 = sand.u32 %s218, 1
        %s324 = scalar_lea.sflag [#allocation6], %s323
        %s325 = sand.u32 %s218, 1
        %s326 = smul.addr %s325, 512
        %s327 = scalar_lea.vmem [#allocation5], %s326
        %s328 = smul.u32 32, %s27
        %p329 = scmp.lt.s32.totalorder %s328, 63
        %s330 = scalar_select %p329, %s328, 63
        %s331 = smul.addr %s330, 4
        %s332 = scalar_lea.vmem %s0, %s331
        %s333 = smul.u32 32, %s27
        %s334 = smul.u32 32, %s27
        %p335 = scmp.lt.s32.totalorder %s334, 63
        %s336 = scalar_select %p335, %s334, 63
        %s337 = smul.addr %s336, 4
        %s338 = scalar_lea.vmem %s1, %s337
        %s339 = smul.u32 32, %s27
        %s340 = smul.u32 32, %s27
        %s341 = smul.u32 32, %s27
        %v343 = vld [vmem:[%s332] sm:$0xf]
        %v344 = vld [vmem:[%s332 + $0x4] sm:$0xf]
        %v345 = vld [vmem:[%s332 + $0x8] sm:$0xf]
        %v346 = vld [vmem:[%s332 + $0xc] sm:$0xf]
        %v347 = vld [vmem:[%s332 + $0x10] sm:$0xf]
        %v348 = vld [vmem:[%s332 + $0x14] sm:$0xf]
        %v349 = vld [vmem:[%s332 + $0x18] sm:$0xf]
        %v350 = vld [vmem:[%s332 + $0x1c] sm:$0xf]
        %v351 = vld [vmem:[%s332 + $0x20] sm:$0xf]
        %v352 = vld [vmem:[%s332 + $0x24] sm:$0xf]
        %v353 = vld [vmem:[%s332 + $0x28] sm:$0xf]
        %v354 = vld [vmem:[%s332 + $0x2c] sm:$0xf]
        %v355 = vld [vmem:[%s332 + $0x30] sm:$0xf]
        %v356 = vld [vmem:[%s332 + $0x34] sm:$0xf]
        %v357 = vld [vmem:[%s332 + $0x38] sm:$0xf]
        %v358 = vld [vmem:[%s332 + $0x3c] sm:$0xf]
        %v359 = vld [vmem:[%s332 + $0x40] sm:$0xf]
        %v360 = vld [vmem:[%s332 + $0x44] sm:$0xf]
        %v361 = vld [vmem:[%s332 + $0x48] sm:$0xf]
        %v362 = vld [vmem:[%s332 + $0x4c] sm:$0xf]
        %v363 = vld [vmem:[%s332 + $0x50] sm:$0xf]
        %v364 = vld [vmem:[%s332 + $0x54] sm:$0xf]
        %v365 = vld [vmem:[%s332 + $0x58] sm:$0xf]
        %v366 = vld [vmem:[%s332 + $0x5c] sm:$0xf]
        %v367 = vld [vmem:[%s332 + $0x60] sm:$0xf]
        %v368 = vld [vmem:[%s332 + $0x64] sm:$0xf]
        %v369 = vld [vmem:[%s332 + $0x68] sm:$0xf]
        %v370 = vld [vmem:[%s332 + $0x6c] sm:$0xf]
        %v371 = vld [vmem:[%s332 + $0x70] sm:$0xf]
        %v372 = vld [vmem:[%s332 + $0x74] sm:$0xf]
        %v373 = vld [vmem:[%s332 + $0x78] sm:$0xf]
        %v374 = vld [vmem:[%s332 + $0x7c] sm:$0xf]
        %v375 = vld [vmem:[%s2] sm:$0xff]
        %v376 = vld [vmem:[%s2 + $0x8] sm:$0xff]
        %v377 = vld [vmem:[%s2 + $0x10] sm:$0xff]
        %v378 = vld [vmem:[%s2 + $0x18] sm:$0xff]
        %v379 = vld [vmem:[%s2 + $0x20] sm:$0xff]
        %v380 = vld [vmem:[%s2 + $0x28] sm:$0xff]
        %v381 = vld [vmem:[%s2 + $0x30] sm:$0xff]
        %v382 = vld [vmem:[%s2 + $0x38] sm:$0xff]
        %v383 = vld [vmem:[%s338] sm:$0xf]
        %v384 = vld [vmem:[%s338 + $0x4] sm:$0xf]
        %v385 = vld [vmem:[%s338 + $0x8] sm:$0xf]
        %v386 = vld [vmem:[%s338 + $0xc] sm:$0xf]
        %v387 = vld [vmem:[%s338 + $0x10] sm:$0xf]
        %v388 = vld [vmem:[%s338 + $0x14] sm:$0xf]
        %v389 = vld [vmem:[%s338 + $0x18] sm:$0xf]
        %v390 = vld [vmem:[%s338 + $0x1c] sm:$0xf]
        %v391 = vld [vmem:[%s338 + $0x20] sm:$0xf]
        %v392 = vld [vmem:[%s338 + $0x24] sm:$0xf]
        %v393 = vld [vmem:[%s338 + $0x28] sm:$0xf]
        %v394 = vld [vmem:[%s338 + $0x2c] sm:$0xf]
        %v395 = vld [vmem:[%s338 + $0x30] sm:$0xf]
        %v396 = vld [vmem:[%s338 + $0x34] sm:$0xf]
        %v397 = vld [vmem:[%s338 + $0x38] sm:$0xf]
        %v398 = vld [vmem:[%s338 + $0x3c] sm:$0xf]
        %v399 = vld [vmem:[%s338 + $0x40] sm:$0xf]
        %v400 = vld [vmem:[%s338 + $0x44] sm:$0xf]
        %v401 = vld [vmem:[%s338 + $0x48] sm:$0xf]
        %v402 = vld [vmem:[%s338 + $0x4c] sm:$0xf]
        %v403 = vld [vmem:[%s338 + $0x50] sm:$0xf]
        %v404 = vld [vmem:[%s338 + $0x54] sm:$0xf]
        %v405 = vld [vmem:[%s338 + $0x58] sm:$0xf]
        %v406 = vld [vmem:[%s338 + $0x5c] sm:$0xf]
        %v407 = vld [vmem:[%s338 + $0x60] sm:$0xf]
        %v408 = vld [vmem:[%s338 + $0x64] sm:$0xf]
        %v409 = vld [vmem:[%s338 + $0x68] sm:$0xf]
        %v410 = vld [vmem:[%s338 + $0x6c] sm:$0xf]
        %v411 = vld [vmem:[%s338 + $0x70] sm:$0xf]
        %v412 = vld [vmem:[%s338 + $0x74] sm:$0xf]
        %v413 = vld [vmem:[%s338 + $0x78] sm:$0xf]
        %v414 = vld [vmem:[%s338 + $0x7c] sm:$0xf]
        %v415 = vld [vmem:[%s3] sm:$0xff]
        %v416 = vld [vmem:[%s3 + $0x8] sm:$0xff]
        %v417 = vld [vmem:[%s3 + $0x10] sm:$0xff]
        %v418 = vld [vmem:[%s3 + $0x18] sm:$0xff]
        %v451 = vunpack.c.l.b16 %v383
        %v452 = vunpack.c.l.b16 %v384
        %v453 = vunpack.c.l.b16 %v385
        %v454 = vunpack.c.l.b16 %v386
        %v455 = vunpack.c.l.b16 %v387
        %v456 = vunpack.c.l.b16 %v388
        %v457 = vunpack.c.l.b16 %v389
        %v458 = vunpack.c.l.b16 %v390
        %v459 = vunpack.c.l.b16 %v391
        %v460 = vunpack.c.l.b16 %v392
        %v461 = vunpack.c.l.b16 %v393
        %v462 = vunpack.c.l.b16 %v394
        %v463 = vunpack.c.l.b16 %v395
        %v464 = vunpack.c.l.b16 %v396
        %v465 = vunpack.c.l.b16 %v397
        %v466 = vunpack.c.l.b16 %v398
        %v467 = vunpack.c.l.b16 %v399
        %v468 = vunpack.c.l.b16 %v400
        %v469 = vunpack.c.l.b16 %v401
        %v470 = vunpack.c.l.b16 %v402
        %v471 = vunpack.c.l.b16 %v403
        %v472 = vunpack.c.l.b16 %v404
        %v473 = vunpack.c.l.b16 %v405
        %v474 = vunpack.c.l.b16 %v406
        %v475 = vunpack.c.l.b16 %v407
        %v476 = vunpack.c.l.b16 %v408
        %v477 = vunpack.c.l.b16 %v409
        %v478 = vunpack.c.l.b16 %v410
        %v479 = vunpack.c.l.b16 %v411
        %v480 = vunpack.c.l.b16 %v412
        %v481 = vunpack.c.l.b16 %v413
        %v482 = vunpack.c.l.b16 %v414
        %v483 = vpack.c.b16 %v452, %v451
        %v484 = vpack.c.b16 %v454, %v453
        %v485 = vpack.c.b16 %v456, %v455
        %v486 = vpack.c.b16 %v458, %v457
        %v487 = vpack.c.b16 %v460, %v459
        %v488 = vpack.c.b16 %v462, %v461
        %v489 = vpack.c.b16 %v464, %v463
        %v490 = vpack.c.b16 %v466, %v465
        %v491 = vpack.c.b16 %v468, %v467
        %v492 = vpack.c.b16 %v470, %v469
        %v493 = vpack.c.b16 %v472, %v471
        %v494 = vpack.c.b16 %v474, %v473
        %v495 = vpack.c.b16 %v476, %v475
        %v496 = vpack.c.b16 %v478, %v477
        %v497 = vpack.c.b16 %v480, %v479
        %v498 = vpack.c.b16 %v482, %v481
        %v503 = vunpack.c.l.b16 %v415
        %v504 = vunpack.c.h.b16 %v415
        %v505 = vunpack.c.l.b16 %v416
        %v506 = vunpack.c.h.b16 %v416
        %v507 = vunpack.c.l.b16 %v417
        %v508 = vunpack.c.h.b16 %v417
        %v509 = vunpack.c.l.b16 %v418
        %v510 = vunpack.c.h.b16 %v418
        %v511 = vpack.c.b16 %v505, %v503
        %v512 = vpack.c.b16 %v506, %v504
        %v513 = vpack.c.b16 %v509, %v507
        %v514 = vpack.c.b16 %v510, %v508
        %vm519 = vcmask 261120
        %v521 = vsel %vm519, %v483, 0
        %v524 = vsel %vm519, %v484, 0
        %v527 = vsel %vm519, %v485, 0
        %v530 = vsel %vm519, %v486, 0
        %v533 = vsel %vm519, %v487, 0
        %v536 = vsel %vm519, %v488, 0
        %v539 = vsel %vm519, %v489, 0
        %v542 = vsel %vm519, %v490, 0
        %v545 = vsel %vm519, %v491, 0
        %v548 = vsel %vm519, %v492, 0
        %v551 = vsel %vm519, %v493, 0
        %v554 = vsel %vm519, %v494, 0
        %v557 = vsel %vm519, %v495, 0
        %v560 = vsel %vm519, %v496, 0
        %v563 = vsel %vm519, %v497, 0
        %v566 = vsel %vm519, %v498, 0
        %568 = vmatprep.subr.bf16.mxu0 %v512
        %569 = vmatpush1.bf16.msra.mxu0 %v511
        %570 = vmatprep.subr.bf16.mxu0 %v514
        %571 = vmatpush1.bf16.msra.mxu0 %v513
        %572 = vmatprep.subr.bf16.mxu0 0
        %573 = vmatpush1.bf16.msra.mxu0 0
        %574 = vmatprep.subr.bf16.mxu0 0
        %575 = vmatpush1.bf16.msra.mxu0 0
        %576 = vmatprep.subr.bf16.mxu0 0
        %577 = vmatpush1.bf16.msra.mxu0 0
        %578 = vmatprep.subr.bf16.mxu0 0
        %579 = vmatpush1.bf16.msra.mxu0 0
        %580 = vmatprep.subr.bf16.mxu0 0
        %581 = vmatpush1.bf16.msra.mxu0 0
        %582 = vmatprep.subr.bf16.mxu0 0
        %583 = vmatpush1.bf16.msra.mxu0 0
        %584 = vmatprep.subr.bf16.mxu0 0
        %585 = vmatpush1.bf16.msra.mxu0 0
        %586 = vmatprep.subr.bf16.mxu0 0
        %587 = vmatpush1.bf16.msra.mxu0 0
        %588 = vmatprep.subr.bf16.mxu0 0
        %589 = vmatpush1.bf16.msra.mxu0 0
        %590 = vmatprep.subr.bf16.mxu0 0
        %591 = vmatpush1.bf16.msra.mxu0 0
        %592 = vmatprep.subr.bf16.mxu0 0
        %593 = vmatpush1.bf16.msra.mxu0 0
        %594 = vmatprep.subr.bf16.mxu0 0
        %595 = vmatpush1.bf16.msra.mxu0 0
        %596 = vmatprep.subr.bf16.mxu0 0
        %597 = vmatpush1.bf16.msra.mxu0 0
        %598 = vmatprep.subr.bf16.mxu0 0
        %599 = vmatpush1.bf16.msra.mxu0 0
        %600 = vmatprep.mubr.bf16.mxu0 0
        %601 = vmatmul.mubr.bf16.gmra.mrb[0].mxu0 %v521
        %v602 = vpop.f32.mrb[0].mxu0
        %v603 = vadd.f32 0.0, %v602
        %v604 = vpop.f32.mrb[0].mxu0
        %v605 = vadd.f32 0.0, %v604
        %v606 = vpop.f32.mrb[0].mxu0
        %v607 = vadd.f32 0.0, %v606
        %v608 = vpop.f32.mrb[0].mxu0
        %v609 = vadd.f32 0.0, %v608
        %610 = vmatprep.mubr.bf16.mxu0 0
        %611 = vmatmul.mubr.bf16.gmra.mrb[0].mxu0 %v524
        %v612 = vpop.f32.mrb[0].mxu0
        %v613 = vadd.f32 0.0, %v612
        %v614 = vpop.f32.mrb[0].mxu0
        %v615 = vadd.f32 0.0, %v614
        %v616 = vpop.f32.mrb[0].mxu0
        %v617 = vadd.f32 0.0, %v616
        %v618 = vpop.f32.mrb[0].mxu0
        %v619 = vadd.f32 0.0, %v618
        %620 = vmatprep.mubr.bf16.mxu0 0
        %621 = vmatmul.mubr.bf16.gmra.mrb[0].mxu0 %v527
        %v622 = vpop.f32.mrb[0].mxu0
        %v623 = vadd.f32 0.0, %v622
        %v624 = vpop.f32.mrb[0].mxu0
        %v625 = vadd.f32 0.0, %v624
        %v626 = vpop.f32.mrb[0].mxu0
        %v627 = vadd.f32 0.0, %v626
        %v628 = vpop.f32.mrb[0].mxu0
        %v629 = vadd.f32 0.0, %v628
        %630 = vmatprep.mubr.bf16.mxu0 0
        %631 = vmatmul.mubr.bf16.gmra.mrb[0].mxu0 %v530
        %v632 = vpop.f32.mrb[0].mxu0
        %v633 = vadd.f32 0.0, %v632
        %v634 = vpop.f32.mrb[0].mxu0
        %v635 = vadd.f32 0.0, %v634
        %v636 = vpop.f32.mrb[0].mxu0
        %v637 = vadd.f32 0.0, %v636
        %v638 = vpop.f32.mrb[0].mxu0
        %v639 = vadd.f32 0.0, %v638
        %640 = vmatprep.mubr.bf16.mxu0 0
        %641 = vmatmul.mubr.bf16.gmra.mrb[0].mxu0 %v533
        %v642 = vpop.f32.mrb[0].mxu0
        %v643 = vadd.f32 0.0, %v642
        %v644 = vpop.f32.mrb[0].mxu0
        %v645 = vadd.f32 0.0, %v644
        %v646 = vpop.f32.mrb[0].mxu0
        %v647 = vadd.f32 0.0, %v646
        %v648 = vpop.f32.mrb[0].mxu0
        %v649 = vadd.f32 0.0, %v648
        %650 = vmatprep.mubr.bf16.mxu0 0
        %651 = vmatmul.mubr.bf16.gmra.mrb[0].mxu0 %v536
        %v652 = vpop.f32.mrb[0].mxu0
        %v653 = vadd.f32 0.0, %v652
        %v654 = vpop.f32.mrb[0].mxu0
        %v655 = vadd.f32 0.0, %v654
        %v656 = vpop.f32.mrb[0].mxu0
        %v657 = vadd.f32 0.0, %v656
        %v658 = vpop.f32.mrb[0].mxu0
        %v659 = vadd.f32 0.0, %v658
        %660 = vmatprep.mubr.bf16.mxu0 0
        %661 = vmatmul.mubr.bf16.gmra.mrb[0].mxu0 %v539
        %v662 = vpop.f32.mrb[0].mxu0
        %v663 = vadd.f32 0.0, %v662
        %v664 = vpop.f32.mrb[0].mxu0
        %v665 = vadd.f32 0.0, %v664
        %v666 = vpop.f32.mrb[0].mxu0
        %v667 = vadd.f32 0.0, %v666
        %v668 = vpop.f32.mrb[0].mxu0
        %v669 = vadd.f32 0.0, %v668
        %670 = vmatprep.mubr.bf16.mxu0 0
        %671 = vmatmul.mubr.bf16.gmra.mrb[0].mxu0 %v542
        %v672 = vpop.f32.mrb[0].mxu0
        %v673 = vadd.f32 0.0, %v672
        %v674 = vpop.f32.mrb[0].mxu0
        %v675 = vadd.f32 0.0, %v674
        %v676 = vpop.f32.mrb[0].mxu0
        %v677 = vadd.f32 0.0, %v676
        %v678 = vpop.f32.mrb[0].mxu0
        %v679 = vadd.f32 0.0, %v678
        %680 = vmatprep.mubr.bf16.mxu0 0
        %681 = vmatmul.mubr.bf16.gmra.mrb[0].mxu0 %v545
        %v682 = vpop.f32.mrb[0].mxu0
        %v683 = vadd.f32 0.0, %v682
        %v684 = vpop.f32.mrb[0].mxu0
        %v685 = vadd.f32 0.0, %v684
        %v686 = vpop.f32.mrb[0].mxu0
        %v687 = vadd.f32 0.0, %v686
        %v688 = vpop.f32.mrb[0].mxu0
        %v689 = vadd.f32 0.0, %v688
        %690 = vmatprep.mubr.bf16.mxu0 0
        %691 = vmatmul.mubr.bf16.gmra.mrb[0].mxu0 %v548
        %v692 = vpop.f32.mrb[0].mxu0
        %v693 = vadd.f32 0.0, %v692
        %v694 = vpop.f32.mrb[0].mxu0
        %v695 = vadd.f32 0.0, %v694
        %v696 = vpop.f32.mrb[0].mxu0
        %v697 = vadd.f32 0.0, %v696
        %v698 = vpop.f32.mrb[0].mxu0
        %v699 = vadd.f32 0.0, %v698
        %700 = vmatprep.mubr.bf16.mxu0 0
        %701 = vmatmul.mubr.bf16.gmra.mrb[0].mxu0 %v551
        %v702 = vpop.f32.mrb[0].mxu0
        %v703 = vadd.f32 0.0, %v702
        %v704 = vpop.f32.mrb[0].mxu0
        %v705 = vadd.f32 0.0, %v704
        %v706 = vpop.f32.mrb[0].mxu0
        %v707 = vadd.f32 0.0, %v706
        %v708 = vpop.f32.mrb[0].mxu0
        %v709 = vadd.f32 0.0, %v708
        %710 = vmatprep.mubr.bf16.mxu0 0
        %711 = vmatmul.mubr.bf16.gmra.mrb[0].mxu0 %v554
        %v712 = vpop.f32.mrb[0].mxu0
        %v713 = vadd.f32 0.0, %v712
        %v714 = vpop.f32.mrb[0].mxu0
        %v715 = vadd.f32 0.0, %v714
        %v716 = vpop.f32.mrb[0].mxu0
        %v717 = vadd.f32 0.0, %v716
        %v718 = vpop.f32.mrb[0].mxu0
        %v719 = vadd.f32 0.0, %v718
        %720 = vmatprep.mubr.bf16.mxu0 0
        %721 = vmatmul.mubr.bf16.gmra.mrb[0].mxu0 %v557
        %v722 = vpop.f32.mrb[0].mxu0
        %v723 = vadd.f32 0.0, %v722
        %v724 = vpop.f32.mrb[0].mxu0
        %v725 = vadd.f32 0.0, %v724
        %v726 = vpop.f32.mrb[0].mxu0
        %v727 = vadd.f32 0.0, %v726
        %v728 = vpop.f32.mrb[0].mxu0
        %v729 = vadd.f32 0.0, %v728
        %730 = vmatprep.mubr.bf16.mxu0 0
        %731 = vmatmul.mubr.bf16.gmra.mrb[0].mxu0 %v560
        %v732 = vpop.f32.mrb[0].mxu0
        %v733 = vadd.f32 0.0, %v732
        %v734 = vpop.f32.mrb[0].mxu0
        %v735 = vadd.f32 0.0, %v734
        %v736 = vpop.f32.mrb[0].mxu0
        %v737 = vadd.f32 0.0, %v736
        %v738 = vpop.f32.mrb[0].mxu0
        %v739 = vadd.f32 0.0, %v738
        %740 = vmatprep.mubr.bf16.mxu0 0
        %741 = vmatmul.mubr.bf16.gmra.mrb[0].mxu0 %v563
        %v742 = vpop.f32.mrb[0].mxu0
        %v743 = vadd.f32 0.0, %v742
        %v744 = vpop.f32.mrb[0].mxu0
        %v745 = vadd.f32 0.0, %v744
        %v746 = vpop.f32.mrb[0].mxu0
        %v747 = vadd.f32 0.0, %v746
        %v748 = vpop.f32.mrb[0].mxu0
        %v749 = vadd.f32 0.0, %v748
        %750 = vmatprep.mubr.bf16.mxu0 0
        %751 = vmatmul.mubr.bf16.gmra.mrb[0].mxu0 %v566
        %v752 = vpop.f32.mrb[0].mxu0
        %v753 = vadd.f32 0.0, %v752
        %v754 = vpop.f32.mrb[0].mxu0
        %v755 = vadd.f32 0.0, %v754
        %v756 = vpop.f32.mrb[0].mxu0
        %v757 = vadd.f32 0.0, %v756
        %v758 = vpop.f32.mrb[0].mxu0
        %v759 = vadd.f32 0.0, %v758
        %760 = vdwg.mxu0
        %v793 = vunpack.c.l.b16 %v343
        %v794 = vunpack.c.l.b16 %v344
        %v795 = vunpack.c.l.b16 %v345
        %v796 = vunpack.c.l.b16 %v346
        %v797 = vunpack.c.l.b16 %v347
        %v798 = vunpack.c.l.b16 %v348
        %v799 = vunpack.c.l.b16 %v349
        %v800 = vunpack.c.l.b16 %v350
        %v801 = vunpack.c.l.b16 %v351
        %v802 = vunpack.c.l.b16 %v352
        %v803 = vunpack.c.l.b16 %v353
        %v804 = vunpack.c.l.b16 %v354
        %v805 = vunpack.c.l.b16 %v355
        %v806 = vunpack.c.l.b16 %v356
        %v807 = vunpack.c.l.b16 %v357
        %v808 = vunpack.c.l.b16 %v358
        %v809 = vunpack.c.l.b16 %v359
        %v810 = vunpack.c.l.b16 %v360
        %v811 = vunpack.c.l.b16 %v361
        %v812 = vunpack.c.l.b16 %v362
        %v813 = vunpack.c.l.b16 %v363
        %v814 = vunpack.c.l.b16 %v364
        %v815 = vunpack.c.l.b16 %v365
        %v816 = vunpack.c.l.b16 %v366
        %v817 = vunpack.c.l.b16 %v367
        %v818 = vunpack.c.l.b16 %v368
        %v819 = vunpack.c.l.b16 %v369
        %v820 = vunpack.c.l.b16 %v370
        %v821 = vunpack.c.l.b16 %v371
        %v822 = vunpack.c.l.b16 %v372
        %v823 = vunpack.c.l.b16 %v373
        %v824 = vunpack.c.l.b16 %v374
        %v825 = vpack.c.b16 %v794, %v793
        %v826 = vpack.c.b16 %v796, %v795
        %v827 = vpack.c.b16 %v798, %v797
        %v828 = vpack.c.b16 %v800, %v799
        %v829 = vpack.c.b16 %v802, %v801
        %v830 = vpack.c.b16 %v804, %v803
        %v831 = vpack.c.b16 %v806, %v805
        %v832 = vpack.c.b16 %v808, %v807
        %v833 = vpack.c.b16 %v810, %v809
        %v834 = vpack.c.b16 %v812, %v811
        %v835 = vpack.c.b16 %v814, %v813
        %v836 = vpack.c.b16 %v816, %v815
        %v837 = vpack.c.b16 %v818, %v817
        %v838 = vpack.c.b16 %v820, %v819
        %v839 = vpack.c.b16 %v822, %v821
        %v840 = vpack.c.b16 %v824, %v823
        %v849 = vunpack.c.l.b16 %v375
        %v850 = vunpack.c.h.b16 %v375
        %v851 = vunpack.c.l.b16 %v376
        %v852 = vunpack.c.h.b16 %v376
        %v853 = vunpack.c.l.b16 %v377
        %v854 = vunpack.c.h.b16 %v377
        %v855 = vunpack.c.l.b16 %v378
        %v856 = vunpack.c.h.b16 %v378
        %v857 = vunpack.c.l.b16 %v379
        %v858 = vunpack.c.h.b16 %v379
        %v859 = vunpack.c.l.b16 %v380
        %v860 = vunpack.c.h.b16 %v380
        %v861 = vunpack.c.l.b16 %v381
        %v862 = vunpack.c.h.b16 %v381
        %v863 = vunpack.c.l.b16 %v382
        %v864 = vunpack.c.h.b16 %v382
        %v865 = vpack.c.b16 %v851, %v849
        %v866 = vpack.c.b16 %v852, %v850
        %v867 = vpack.c.b16 %v855, %v853
        %v868 = vpack.c.b16 %v856, %v854
        %v869 = vpack.c.b16 %v859, %v857
        %v870 = vpack.c.b16 %v860, %v858
        %v871 = vpack.c.b16 %v863, %v861
        %v872 = vpack.c.b16 %v864, %v862
        %vm881 = vcmask 523264
        %v883 = vsel %vm881, %v825, 0
        %v886 = vsel %vm881, %v826, 0
        %v889 = vsel %vm881, %v827, 0
        %v892 = vsel %vm881, %v828, 0
        %v895 = vsel %vm881, %v829, 0
        %v898 = vsel %vm881, %v830, 0
        %v901 = vsel %vm881, %v831, 0
        %v904 = vsel %vm881, %v832, 0
        %v907 = vsel %vm881, %v833, 0
        %v910 = vsel %vm881, %v834, 0
        %v913 = vsel %vm881, %v835, 0
        %v916 = vsel %vm881, %v836, 0
        %v919 = vsel %vm881, %v837, 0
        %v922 = vsel %vm881, %v838, 0
        %v925 = vsel %vm881, %v839, 0
        %v928 = vsel %vm881, %v840, 0
        %930 = vmatprep.subr.bf16.mxu0 %v866
        %931 = vmatpush1.bf16.msra.mxu0 %v865
        %932 = vmatprep.subr.bf16.mxu0 %v868
        %933 = vmatpush1.bf16.msra.mxu0 %v867
        %934 = vmatprep.subr.bf16.mxu0 %v870
        %935 = vmatpush1.bf16.msra.mxu0 %v869
        %936 = vmatprep.subr.bf16.mxu0 %v872
        %937 = vmatpush1.bf16.msra.mxu0 %v871
        %938 = vmatprep.subr.bf16.mxu0 0
        %939 = vmatpush1.bf16.msra.mxu0 0
        %940 = vmatprep.subr.bf16.mxu0 0
        %941 = vmatpush1.bf16.msra.mxu0 0
        %942 = vmatprep.subr.bf16.mxu0 0
        %943 = vmatpush1.bf16.msra.mxu0 0
        %944 = vmatprep.subr.bf16.mxu0 0
        %945 = vmatpush1.bf16.msra.mxu0 0
        %946 = vmatprep.subr.bf16.mxu0 0
        %947 = vmatpush1.bf16.msra.mxu0 0
        %948 = vmatprep.subr.bf16.mxu0 0
        %949 = vmatpush1.bf16.msra.mxu0 0
        %950 = vmatprep.subr.bf16.mxu0 0
        %951 = vmatpush1.bf16.msra.mxu0 0
        %952 = vmatprep.subr.bf16.mxu0 0
        %953 = vmatpush1.bf16.msra.mxu0 0
        %954 = vmatprep.subr.bf16.mxu0 0
        %955 = vmatpush1.bf16.msra.mxu0 0
        %956 = vmatprep.subr.bf16.mxu0 0
        %957 = vmatpush1.bf16.msra.mxu0 0
        %958 = vmatprep.subr.bf16.mxu0 0
        %959 = vmatpush1.bf16.msra.mxu0 0
        %960 = vmatprep.subr.bf16.mxu0 0
        %961 = vmatpush1.bf16.msra.mxu0 0
        %962 = vmatprep.mubr.bf16.mxu0 0
        %963 = vmatmul.mubr.bf16.gmra.mrb[0].mxu0 %v883
        %v964 = vpop.f32.mrb[0].mxu0
        %v965 = vadd.f32 %v603, %v964
        %v966 = vpop.f32.mrb[0].mxu0
        %v967 = vadd.f32 %v605, %v966
        %v968 = vpop.f32.mrb[0].mxu0
        %v969 = vadd.f32 %v607, %v968
        %v970 = vpop.f32.mrb[0].mxu0
        %v971 = vadd.f32 %v609, %v970
        %972 = vmatprep.mubr.bf16.mxu0 0
        %973 = vmatmul.mubr.bf16.gmra.mrb[0].mxu0 %v886
        %v974 = vpop.f32.mrb[0].mxu0
        %v975 = vadd.f32 %v613, %v974
        %v976 = vpop.f32.mrb[0].mxu0
        %v977 = vadd.f32 %v615, %v976
        %v978 = vpop.f32.mrb[0].mxu0
        %v979 = vadd.f32 %v617, %v978
        %v980 = vpop.f32.mrb[0].mxu0
        %v981 = vadd.f32 %v619, %v980
        %982 = vmatprep.mubr.bf16.mxu0 0
        %983 = vmatmul.mubr.bf16.gmra.mrb[0].mxu0 %v889
        %v984 = vpop.f32.mrb[0].mxu0
        %v985 = vadd.f32 %v623, %v984
        %v986 = vpop.f32.mrb[0].mxu0
        %v987 = vadd.f32 %v625, %v986
        %v988 = vpop.f32.mrb[0].mxu0
        %v989 = vadd.f32 %v627, %v988
        %v990 = vpop.f32.mrb[0].mxu0
        %v991 = vadd.f32 %v629, %v990
        %992 = vmatprep.mubr.bf16.mxu0 0
        %993 = vmatmul.mubr.bf16.gmra.mrb[0].mxu0 %v892
        %v994 = vpop.f32.mrb[0].mxu0
        %v995 = vadd.f32 %v633, %v994
        %v996 = vpop.f32.mrb[0].mxu0
        %v997 = vadd.f32 %v635, %v996
        %v998 = vpop.f32.mrb[0].mxu0
        %v999 = vadd.f32 %v637, %v998
        %v1000 = vpop.f32.mrb[0].mxu0
        %v1001 = vadd.f32 %v639, %v1000
        %1002 = vmatprep.mubr.bf16.mxu0 0
        %1003 = vmatmul.mubr.bf16.gmra.mrb[0].mxu0 %v895
        %v1004 = vpop.f32.mrb[0].mxu0
        %v1005 = vadd.f32 %v643, %v1004
        %v1006 = vpop.f32.mrb[0].mxu0
        %v1007 = vadd.f32 %v645, %v1006
        %v1008 = vpop.f32.mrb[0].mxu0
        %v1009 = vadd.f32 %v647, %v1008
        %v1010 = vpop.f32.mrb[0].mxu0
        %v1011 = vadd.f32 %v649, %v1010
        %1012 = vmatprep.mubr.bf16.mxu0 0
        %1013 = vmatmul.mubr.bf16.gmra.mrb[0].mxu0 %v898
        %v1014 = vpop.f32.mrb[0].mxu0
        %v1015 = vadd.f32 %v653, %v1014
        %v1016 = vpop.f32.mrb[0].mxu0
        %v1017 = vadd.f32 %v655, %v1016
        %v1018 = vpop.f32.mrb[0].mxu0
        %v1019 = vadd.f32 %v657, %v1018
        %v1020 = vpop.f32.mrb[0].mxu0
        %v1021 = vadd.f32 %v659, %v1020
        %1022 = vmatprep.mubr.bf16.mxu0 0
        %1023 = vmatmul.mubr.bf16.gmra.mrb[0].mxu0 %v901
        %v1024 = vpop.f32.mrb[0].mxu0
        %v1025 = vadd.f32 %v663, %v1024
        %v1026 = vpop.f32.mrb[0].mxu0
        %v1027 = vadd.f32 %v665, %v1026
        %v1028 = vpop.f32.mrb[0].mxu0
        %v1029 = vadd.f32 %v667, %v1028
        %v1030 = vpop.f32.mrb[0].mxu0
        %v1031 = vadd.f32 %v669, %v1030
        %1032 = vmatprep.mubr.bf16.mxu0 0
        %1033 = vmatmul.mubr.bf16.gmra.mrb[0].mxu0 %v904
        %v1034 = vpop.f32.mrb[0].mxu0
        %v1035 = vadd.f32 %v673, %v1034
        %v1036 = vpop.f32.mrb[0].mxu0
        %v1037 = vadd.f32 %v675, %v1036
        %v1038 = vpop.f32.mrb[0].mxu0
        %v1039 = vadd.f32 %v677, %v1038
        %v1040 = vpop.f32.mrb[0].mxu0
        %v1041 = vadd.f32 %v679, %v1040
        %1042 = vmatprep.mubr.bf16.mxu0 0
        %1043 = vmatmul.mubr.bf16.gmra.mrb[0].mxu0 %v907
        %v1044 = vpop.f32.mrb[0].mxu0
        %v1045 = vadd.f32 %v683, %v1044
        %v1046 = vpop.f32.mrb[0].mxu0
        %v1047 = vadd.f32 %v685, %v1046
        %v1048 = vpop.f32.mrb[0].mxu0
        %v1049 = vadd.f32 %v687, %v1048
        %v1050 = vpop.f32.mrb[0].mxu0
        %v1051 = vadd.f32 %v689, %v1050
        %1052 = vmatprep.mubr.bf16.mxu0 0
        %1053 = vmatmul.mubr.bf16.gmra.mrb[0].mxu0 %v910
        %v1054 = vpop.f32.mrb[0].mxu0
        %v1055 = vadd.f32 %v693, %v1054
        %v1056 = vpop.f32.mrb[0].mxu0
        %v1057 = vadd.f32 %v695, %v1056
        %v1058 = vpop.f32.mrb[0].mxu0
        %v1059 = vadd.f32 %v697, %v1058
        %v1060 = vpop.f32.mrb[0].mxu0
        %v1061 = vadd.f32 %v699, %v1060
        %1062 = vmatprep.mubr.bf16.mxu0 0
        %1063 = vmatmul.mubr.bf16.gmra.mrb[0].mxu0 %v913
        %v1064 = vpop.f32.mrb[0].mxu0
        %v1065 = vadd.f32 %v703, %v1064
        %v1066 = vpop.f32.mrb[0].mxu0
        %v1067 = vadd.f32 %v705, %v1066
        %v1068 = vpop.f32.mrb[0].mxu0
        %v1069 = vadd.f32 %v707, %v1068
        %v1070 = vpop.f32.mrb[0].mxu0
        %v1071 = vadd.f32 %v709, %v1070
        %1072 = vmatprep.mubr.bf16.mxu0 0
        %1073 = vmatmul.mubr.bf16.gmra.mrb[0].mxu0 %v916
        %v1074 = vpop.f32.mrb[0].mxu0
        %v1075 = vadd.f32 %v713, %v1074
        %v1076 = vpop.f32.mrb[0].mxu0
        %v1077 = vadd.f32 %v715, %v1076
        %v1078 = vpop.f32.mrb[0].mxu0
        %v1079 = vadd.f32 %v717, %v1078
        %v1080 = vpop.f32.mrb[0].mxu0
        %v1081 = vadd.f32 %v719, %v1080
        %1082 = vmatprep.mubr.bf16.mxu0 0
        %1083 = vmatmul.mubr.bf16.gmra.mrb[0].mxu0 %v919
        %v1084 = vpop.f32.mrb[0].mxu0
        %v1085 = vadd.f32 %v723, %v1084
        %v1086 = vpop.f32.mrb[0].mxu0
        %v1087 = vadd.f32 %v725, %v1086
        %v1088 = vpop.f32.mrb[0].mxu0
        %v1089 = vadd.f32 %v727, %v1088
        %v1090 = vpop.f32.mrb[0].mxu0
        %v1091 = vadd.f32 %v729, %v1090
        %1092 = vmatprep.mubr.bf16.mxu0 0
        %1093 = vmatmul.mubr.bf16.gmra.mrb[0].mxu0 %v922
        %v1094 = vpop.f32.mrb[0].mxu0
        %v1095 = vadd.f32 %v733, %v1094
        %v1096 = vpop.f32.mrb[0].mxu0
        %v1097 = vadd.f32 %v735, %v1096
        %v1098 = vpop.f32.mrb[0].mxu0
        %v1099 = vadd.f32 %v737, %v1098
        %v1100 = vpop.f32.mrb[0].mxu0
        %v1101 = vadd.f32 %v739, %v1100
        %1102 = vmatprep.mubr.bf16.mxu0 0
        %1103 = vmatmul.mubr.bf16.gmra.mrb[0].mxu0 %v925
        %v1104 = vpop.f32.mrb[0].mxu0
        %v1105 = vadd.f32 %v743, %v1104
        %v1106 = vpop.f32.mrb[0].mxu0
        %v1107 = vadd.f32 %v745, %v1106
        %v1108 = vpop.f32.mrb[0].mxu0
        %v1109 = vadd.f32 %v747, %v1108
        %v1110 = vpop.f32.mrb[0].mxu0
        %v1111 = vadd.f32 %v749, %v1110
        %1112 = vmatprep.mubr.bf16.mxu0 0
        %1113 = vmatmul.mubr.bf16.gmra.mrb[0].mxu0 %v928
        %v1114 = vpop.f32.mrb[0].mxu0
        %v1115 = vadd.f32 %v753, %v1114
        %v1116 = vpop.f32.mrb[0].mxu0
        %v1117 = vadd.f32 %v755, %v1116
        %v1118 = vpop.f32.mrb[0].mxu0
        %v1119 = vadd.f32 %v757, %v1118
        %v1120 = vpop.f32.mrb[0].mxu0
        %v1121 = vadd.f32 %v759, %v1120
        %1122 = vdwg.mxu0
        %v1123 = vld [vmem:[%s4] sm:$0x3]
        %v1125 = vlaneseq
        %v1126 = vshrl.u32 %v1125, 7
        %v1127 = vsub.s32 0, %v1126
        %v1128 = vrot.slane %v1123, %v1127
        %v1129 = vlaneseq
        %v1130 = vshrl.u32 %v1129, 7
        %v1131 = vsub.s32 1, %v1130
        %v1132 = vrot.slane %v1123, %v1131
        %v1135 = vadd.f32 %v965, %v1128
        %v1136 = vadd.f32 %v967, %v1132
        %v1137 = vadd.f32 %v969, %v1128
        %v1138 = vadd.f32 %v971, %v1132
        %v1139 = vadd.f32 %v975, %v1128
        %v1140 = vadd.f32 %v977, %v1132
        %v1141 = vadd.f32 %v979, %v1128
        %v1142 = vadd.f32 %v981, %v1132
        %v1143 = vadd.f32 %v985, %v1128
        %v1144 = vadd.f32 %v987, %v1132
        %v1145 = vadd.f32 %v989, %v1128
        %v1146 = vadd.f32 %v991, %v1132
        %v1147 = vadd.f32 %v995, %v1128
        %v1148 = vadd.f32 %v997, %v1132
        %v1149 = vadd.f32 %v999, %v1128
        %v1150 = vadd.f32 %v1001, %v1132
        %v1151 = vadd.f32 %v1005, %v1128
        %v1152 = vadd.f32 %v1007, %v1132
        %v1153 = vadd.f32 %v1009, %v1128
        %v1154 = vadd.f32 %v1011, %v1132
        %v1155 = vadd.f32 %v1015, %v1128
        %v1156 = vadd.f32 %v1017, %v1132
        %v1157 = vadd.f32 %v1019, %v1128
        %v1158 = vadd.f32 %v1021, %v1132
        %v1159 = vadd.f32 %v1025, %v1128
        %v1160 = vadd.f32 %v1027, %v1132
        %v1161 = vadd.f32 %v1029, %v1128
        %v1162 = vadd.f32 %v1031, %v1132
        %v1163 = vadd.f32 %v1035, %v1128
        %v1164 = vadd.f32 %v1037, %v1132
        %v1165 = vadd.f32 %v1039, %v1128
        %v1166 = vadd.f32 %v1041, %v1132
        %v1167 = vadd.f32 %v1045, %v1128
        %v1168 = vadd.f32 %v1047, %v1132
        %v1169 = vadd.f32 %v1049, %v1128
        %v1170 = vadd.f32 %v1051, %v1132
        %v1171 = vadd.f32 %v1055, %v1128
        %v1172 = vadd.f32 %v1057, %v1132
        %v1173 = vadd.f32 %v1059, %v1128
        %v1174 = vadd.f32 %v1061, %v1132
        %v1175 = vadd.f32 %v1065, %v1128
        %v1176 = vadd.f32 %v1067, %v1132
        %v1177 = vadd.f32 %v1069, %v1128
        %v1178 = vadd.f32 %v1071, %v1132
        %v1179 = vadd.f32 %v1075, %v1128
        %v1180 = vadd.f32 %v1077, %v1132
        %v1181 = vadd.f32 %v1079, %v1128
        %v1182 = vadd.f32 %v1081, %v1132
        %v1183 = vadd.f32 %v1085, %v1128
        %v1184 = vadd.f32 %v1087, %v1132
        %v1185 = vadd.f32 %v1089, %v1128
        %v1186 = vadd.f32 %v1091, %v1132
        %v1187 = vadd.f32 %v1095, %v1128
        %v1188 = vadd.f32 %v1097, %v1132
        %v1189 = vadd.f32 %v1099, %v1128
        %v1190 = vadd.f32 %v1101, %v1132
        %v1191 = vadd.f32 %v1105, %v1128
        %v1192 = vadd.f32 %v1107, %v1132
        %v1193 = vadd.f32 %v1109, %v1128
        %v1194 = vadd.f32 %v1111, %v1132
        %v1195 = vadd.f32 %v1115, %v1128
        %v1196 = vadd.f32 %v1117, %v1132
        %v1197 = vadd.f32 %v1119, %v1128
        %v1198 = vadd.f32 %v1121, %v1132
        %v1199 = vmul.f32 %v1135, 0.2
        %v1200 = vmul.f32 %v1136, 0.2
        %v1201 = vmul.f32 %v1137, 0.2
        %v1202 = vmul.f32 %v1138, 0.2
        %v1203 = vmul.f32 %v1139, 0.2
        %v1204 = vmul.f32 %v1140, 0.2
        %v1205 = vmul.f32 %v1141, 0.2
        %v1206 = vmul.f32 %v1142, 0.2
        %v1207 = vmul.f32 %v1143, 0.2
        %v1208 = vmul.f32 %v1144, 0.2
        %v1209 = vmul.f32 %v1145, 0.2
        %v1210 = vmul.f32 %v1146, 0.2
        %v1211 = vmul.f32 %v1147, 0.2
        %v1212 = vmul.f32 %v1148, 0.2
        %v1213 = vmul.f32 %v1149, 0.2
        %v1214 = vmul.f32 %v1150, 0.2
        %v1215 = vmul.f32 %v1151, 0.2
        %v1216 = vmul.f32 %v1152, 0.2
        %v1217 = vmul.f32 %v1153, 0.2
        %v1218 = vmul.f32 %v1154, 0.2
        %v1219 = vmul.f32 %v1155, 0.2
        %v1220 = vmul.f32 %v1156, 0.2
        %v1221 = vmul.f32 %v1157, 0.2
        %v1222 = vmul.f32 %v1158, 0.2
        %v1223 = vmul.f32 %v1159, 0.2
        %v1224 = vmul.f32 %v1160, 0.2
        %v1225 = vmul.f32 %v1161, 0.2
        %v1226 = vmul.f32 %v1162, 0.2
        %v1227 = vmul.f32 %v1163, 0.2
        %v1228 = vmul.f32 %v1164, 0.2
        %v1229 = vmul.f32 %v1165, 0.2
        %v1230 = vmul.f32 %v1166, 0.2
        %v1231 = vmul.f32 %v1167, 0.2
        %v1232 = vmul.f32 %v1168, 0.2
        %v1233 = vmul.f32 %v1169, 0.2
        %v1234 = vmul.f32 %v1170, 0.2
        %v1235 = vmul.f32 %v1171, 0.2
        %v1236 = vmul.f32 %v1172, 0.2
        %v1237 = vmul.f32 %v1173, 0.2
        %v1238 = vmul.f32 %v1174, 0.2
        %v1239 = vmul.f32 %v1175, 0.2
        %v1240 = vmul.f32 %v1176, 0.2
        %v1241 = vmul.f32 %v1177, 0.2
        %v1242 = vmul.f32 %v1178, 0.2
        %v1243 = vmul.f32 %v1179, 0.2
        %v1244 = vmul.f32 %v1180, 0.2
        %v1245 = vmul.f32 %v1181, 0.2
        %v1246 = vmul.f32 %v1182, 0.2
        %v1247 = vmul.f32 %v1183, 0.2
        %v1248 = vmul.f32 %v1184, 0.2
        %v1249 = vmul.f32 %v1185, 0.2
        %v1250 = vmul.f32 %v1186, 0.2
        %v1251 = vmul.f32 %v1187, 0.2
        %v1252 = vmul.f32 %v1188, 0.2
        %v1253 = vmul.f32 %v1189, 0.2
        %v1254 = vmul.f32 %v1190, 0.2
        %v1255 = vmul.f32 %v1191, 0.2
        %v1256 = vmul.f32 %v1192, 0.2
        %v1257 = vmul.f32 %v1193, 0.2
        %v1258 = vmul.f32 %v1194, 0.2
        %v1259 = vmul.f32 %v1195, 0.2
        %v1260 = vmul.f32 %v1196, 0.2
        %v1261 = vmul.f32 %v1197, 0.2
        %v1262 = vmul.f32 %v1198, 0.2
        %v1263 = vmax.f32 %v1135, %v1199
        %v1264 = vmax.f32 %v1136, %v1200
        %v1265 = vmax.f32 %v1137, %v1201
        %v1266 = vmax.f32 %v1138, %v1202
        %v1267 = vmax.f32 %v1139, %v1203
        %v1268 = vmax.f32 %v1140, %v1204
        %v1269 = vmax.f32 %v1141, %v1205
        %v1270 = vmax.f32 %v1142, %v1206
        %v1271 = vmax.f32 %v1143, %v1207
        %v1272 = vmax.f32 %v1144, %v1208
        %v1273 = vmax.f32 %v1145, %v1209
        %v1274 = vmax.f32 %v1146, %v1210
        %v1275 = vmax.f32 %v1147, %v1211
        %v1276 = vmax.f32 %v1148, %v1212
        %v1277 = vmax.f32 %v1149, %v1213
        %v1278 = vmax.f32 %v1150, %v1214
        %v1279 = vmax.f32 %v1151, %v1215
        %v1280 = vmax.f32 %v1152, %v1216
        %v1281 = vmax.f32 %v1153, %v1217
        %v1282 = vmax.f32 %v1154, %v1218
        %v1283 = vmax.f32 %v1155, %v1219
        %v1284 = vmax.f32 %v1156, %v1220
        %v1285 = vmax.f32 %v1157, %v1221
        %v1286 = vmax.f32 %v1158, %v1222
        %v1287 = vmax.f32 %v1159, %v1223
        %v1288 = vmax.f32 %v1160, %v1224
        %v1289 = vmax.f32 %v1161, %v1225
        %v1290 = vmax.f32 %v1162, %v1226
        %v1291 = vmax.f32 %v1163, %v1227
        %v1292 = vmax.f32 %v1164, %v1228
        %v1293 = vmax.f32 %v1165, %v1229
        %v1294 = vmax.f32 %v1166, %v1230
        %v1295 = vmax.f32 %v1167, %v1231
        %v1296 = vmax.f32 %v1168, %v1232
        %v1297 = vmax.f32 %v1169, %v1233
        %v1298 = vmax.f32 %v1170, %v1234
        %v1299 = vmax.f32 %v1171, %v1235
        %v1300 = vmax.f32 %v1172, %v1236
        %v1301 = vmax.f32 %v1173, %v1237
        %v1302 = vmax.f32 %v1174, %v1238
        %v1303 = vmax.f32 %v1175, %v1239
        %v1304 = vmax.f32 %v1176, %v1240
        %v1305 = vmax.f32 %v1177, %v1241
        %v1306 = vmax.f32 %v1178, %v1242
        %v1307 = vmax.f32 %v1179, %v1243
        %v1308 = vmax.f32 %v1180, %v1244
        %v1309 = vmax.f32 %v1181, %v1245
        %v1310 = vmax.f32 %v1182, %v1246
        %v1311 = vmax.f32 %v1183, %v1247
        %v1312 = vmax.f32 %v1184, %v1248
        %v1313 = vmax.f32 %v1185, %v1249
        %v1314 = vmax.f32 %v1186, %v1250
        %v1315 = vmax.f32 %v1187, %v1251
        %v1316 = vmax.f32 %v1188, %v1252
        %v1317 = vmax.f32 %v1189, %v1253
        %v1318 = vmax.f32 %v1190, %v1254
        %v1319 = vmax.f32 %v1191, %v1255
        %v1320 = vmax.f32 %v1192, %v1256
        %v1321 = vmax.f32 %v1193, %v1257
        %v1322 = vmax.f32 %v1194, %v1258
        %v1323 = vmax.f32 %v1195, %v1259
        %v1324 = vmax.f32 %v1196, %v1260
        %v1325 = vmax.f32 %v1197, %v1261
        %v1326 = vmax.f32 %v1198, %v1262
        %1327 = vst [vmem:[%s327] sm:$0xff] %v1263
        %1328 = vst [vmem:[%s327 + $0x8] sm:$0xff] %v1264
        %1329 = vst [vmem:[%s327 + $0x10] sm:$0xff] %v1265
        %1330 = vst [vmem:[%s327 + $0x18] sm:$0xff] %v1266
        %1331 = vst [vmem:[%s327 + $0x20] sm:$0xff] %v1267
        %1332 = vst [vmem:[%s327 + $0x28] sm:$0xff] %v1268
        %1333 = vst [vmem:[%s327 + $0x30] sm:$0xff] %v1269
        %1334 = vst [vmem:[%s327 + $0x38] sm:$0xff] %v1270
        %1335 = vst [vmem:[%s327 + $0x40] sm:$0xff] %v1271
        %1336 = vst [vmem:[%s327 + $0x48] sm:$0xff] %v1272
        %1337 = vst [vmem:[%s327 + $0x50] sm:$0xff] %v1273
        %1338 = vst [vmem:[%s327 + $0x58] sm:$0xff] %v1274
        %1339 = vst [vmem:[%s327 + $0x60] sm:$0xff] %v1275
        %1340 = vst [vmem:[%s327 + $0x68] sm:$0xff] %v1276
        %1341 = vst [vmem:[%s327 + $0x70] sm:$0xff] %v1277
        %1342 = vst [vmem:[%s327 + $0x78] sm:$0xff] %v1278
        %1343 = vst [vmem:[%s327 + $0x80] sm:$0xff] %v1279
        %1344 = vst [vmem:[%s327 + $0x88] sm:$0xff] %v1280
        %1345 = vst [vmem:[%s327 + $0x90] sm:$0xff] %v1281
        %1346 = vst [vmem:[%s327 + $0x98] sm:$0xff] %v1282
        %1347 = vst [vmem:[%s327 + $0xa0] sm:$0xff] %v1283
        %1348 = vst [vmem:[%s327 + $0xa8] sm:$0xff] %v1284
        %1349 = vst [vmem:[%s327 + $0xb0] sm:$0xff] %v1285
        %1350 = vst [vmem:[%s327 + $0xb8] sm:$0xff] %v1286
        %1351 = vst [vmem:[%s327 + $0xc0] sm:$0xff] %v1287
        %1352 = vst [vmem:[%s327 + $0xc8] sm:$0xff] %v1288
        %1353 = vst [vmem:[%s327 + $0xd0] sm:$0xff] %v1289
        %1354 = vst [vmem:[%s327 + $0xd8] sm:$0xff] %v1290
        %1355 = vst [vmem:[%s327 + $0xe0] sm:$0xff] %v1291
        %1356 = vst [vmem:[%s327 + $0xe8] sm:$0xff] %v1292
        %1357 = vst [vmem:[%s327 + $0xf0] sm:$0xff] %v1293
        %1358 = vst [vmem:[%s327 + $0xf8] sm:$0xff] %v1294
        %1359 = vst [vmem:[%s327 + $0x100] sm:$0xff] %v1295
        %1360 = vst [vmem:[%s327 + $0x108] sm:$0xff] %v1296
        %1361 = vst [vmem:[%s327 + $0x110] sm:$0xff] %v1297
        %1362 = vst [vmem:[%s327 + $0x118] sm:$0xff] %v1298
        %1363 = vst [vmem:[%s327 + $0x120] sm:$0xff] %v1299
        %1364 = vst [vmem:[%s327 + $0x128] sm:$0xff] %v1300
        %1365 = vst [vmem:[%s327 + $0x130] sm:$0xff] %v1301
        %1366 = vst [vmem:[%s327 + $0x138] sm:$0xff] %v1302
        %1367 = vst [vmem:[%s327 + $0x140] sm:$0xff] %v1303
        %1368 = vst [vmem:[%s327 + $0x148] sm:$0xff] %v1304
        %1369 = vst [vmem:[%s327 + $0x150] sm:$0xff] %v1305
        %1370 = vst [vmem:[%s327 + $0x158] sm:$0xff] %v1306
        %1371 = vst [vmem:[%s327 + $0x160] sm:$0xff] %v1307
        %1372 = vst [vmem:[%s327 + $0x168] sm:$0xff] %v1308
        %1373 = vst [vmem:[%s327 + $0x170] sm:$0xff] %v1309
        %1374 = vst [vmem:[%s327 + $0x178] sm:$0xff] %v1310
        %1375 = vst [vmem:[%s327 + $0x180] sm:$0xff] %v1311
        %1376 = vst [vmem:[%s327 + $0x188] sm:$0xff] %v1312
        %1377 = vst [vmem:[%s327 + $0x190] sm:$0xff] %v1313
        %1378 = vst [vmem:[%s327 + $0x198] sm:$0xff] %v1314
        %1379 = vst [vmem:[%s327 + $0x1a0] sm:$0xff] %v1315
        %1380 = vst [vmem:[%s327 + $0x1a8] sm:$0xff] %v1316
        %1381 = vst [vmem:[%s327 + $0x1b0] sm:$0xff] %v1317
        %1382 = vst [vmem:[%s327 + $0x1b8] sm:$0xff] %v1318
        %1383 = vst [vmem:[%s327 + $0x1c0] sm:$0xff] %v1319
        %1384 = vst [vmem:[%s327 + $0x1c8] sm:$0xff] %v1320
        %1385 = vst [vmem:[%s327 + $0x1d0] sm:$0xff] %v1321
        %1386 = vst [vmem:[%s327 + $0x1d8] sm:$0xff] %v1322
        %1387 = vst [vmem:[%s327 + $0x1e0] sm:$0xff] %v1323
        %1388 = vst [vmem:[%s327 + $0x1e8] sm:$0xff] %v1324
        %1389 = vst [vmem:[%s327 + $0x1f0] sm:$0xff] %v1325
        %1390 = vst [vmem:[%s327 + $0x1f8] sm:$0xff] %v1326
        %v1391 = vld [vmem:[%s5] sm:$0x3]
        %v1393 = vlaneseq
        %v1394 = vshrl.u32 %v1393, 7
        %v1395 = vsub.s32 0, %v1394
        %v1396 = vrot.slane %v1391, %v1395
        %v1397 = vlaneseq
        %v1398 = vshrl.u32 %v1397, 7
        %v1399 = vsub.s32 1, %v1398
        %v1400 = vrot.slane %v1391, %v1399
        %v1403 = vmul.f32 %v1263, %v1396
        %v1404 = vmul.f32 %v1264, %v1400
        %v1405 = vmul.f32 %v1265, %v1396
        %v1406 = vmul.f32 %v1266, %v1400
        %v1407 = vmul.f32 %v1267, %v1396
        %v1408 = vmul.f32 %v1268, %v1400
        %v1409 = vmul.f32 %v1269, %v1396
        %v1410 = vmul.f32 %v1270, %v1400
        %v1411 = vmul.f32 %v1271, %v1396
        %v1412 = vmul.f32 %v1272, %v1400
        %v1413 = vmul.f32 %v1273, %v1396
        %v1414 = vmul.f32 %v1274, %v1400
        %v1415 = vmul.f32 %v1275, %v1396
        %v1416 = vmul.f32 %v1276, %v1400
        %v1417 = vmul.f32 %v1277, %v1396
        %v1418 = vmul.f32 %v1278, %v1400
        %v1419 = vmul.f32 %v1279, %v1396
        %v1420 = vmul.f32 %v1280, %v1400
        %v1421 = vmul.f32 %v1281, %v1396
        %v1422 = vmul.f32 %v1282, %v1400
        %v1423 = vmul.f32 %v1283, %v1396
        %v1424 = vmul.f32 %v1284, %v1400
        %v1425 = vmul.f32 %v1285, %v1396
        %v1426 = vmul.f32 %v1286, %v1400
        %v1427 = vmul.f32 %v1287, %v1396
        %v1428 = vmul.f32 %v1288, %v1400
        %v1429 = vmul.f32 %v1289, %v1396
        %v1430 = vmul.f32 %v1290, %v1400
        %v1431 = vmul.f32 %v1291, %v1396
        %v1432 = vmul.f32 %v1292, %v1400
        %v1433 = vmul.f32 %v1293, %v1396
        %v1434 = vmul.f32 %v1294, %v1400
        %v1435 = vmul.f32 %v1295, %v1396
        %v1436 = vmul.f32 %v1296, %v1400
        %v1437 = vmul.f32 %v1297, %v1396
        %v1438 = vmul.f32 %v1298, %v1400
        %v1439 = vmul.f32 %v1299, %v1396
        %v1440 = vmul.f32 %v1300, %v1400
        %v1441 = vmul.f32 %v1301, %v1396
        %v1442 = vmul.f32 %v1302, %v1400
        %v1443 = vmul.f32 %v1303, %v1396
        %v1444 = vmul.f32 %v1304, %v1400
        %v1445 = vmul.f32 %v1305, %v1396
        %v1446 = vmul.f32 %v1306, %v1400
        %v1447 = vmul.f32 %v1307, %v1396
        %v1448 = vmul.f32 %v1308, %v1400
        %v1449 = vmul.f32 %v1309, %v1396
        %v1450 = vmul.f32 %v1310, %v1400
        %v1451 = vmul.f32 %v1311, %v1396
        %v1452 = vmul.f32 %v1312, %v1400
        %v1453 = vmul.f32 %v1313, %v1396
        %v1454 = vmul.f32 %v1314, %v1400
        %v1455 = vmul.f32 %v1315, %v1396
        %v1456 = vmul.f32 %v1316, %v1400
        %v1457 = vmul.f32 %v1317, %v1396
        %v1458 = vmul.f32 %v1318, %v1400
        %v1459 = vmul.f32 %v1319, %v1396
        %v1460 = vmul.f32 %v1320, %v1400
        %v1461 = vmul.f32 %v1321, %v1396
        %v1462 = vmul.f32 %v1322, %v1400
        %v1463 = vmul.f32 %v1323, %v1396
        %v1464 = vmul.f32 %v1324, %v1400
        %v1465 = vmul.f32 %v1325, %v1396
        %v1466 = vmul.f32 %v1326, %v1400
        %v1467 = vadd.f32 %v1403, %v1404
        %1468 = vadd.xlane.f32.xlu0 %v1467
        %v1469 = vpop.xlane.xlu0 %1468
        %v1470 = vadd.f32 %v1405, %v1406
        %1471 = vadd.xlane.f32.xlu0 %v1470
        %v1472 = vpop.xlane.xlu0 %1471
        %v1473 = vadd.f32 %v1407, %v1408
        %1474 = vadd.xlane.f32.xlu0 %v1473
        %v1475 = vpop.xlane.xlu0 %1474
        %v1476 = vadd.f32 %v1409, %v1410
        %1477 = vadd.xlane.f32.xlu0 %v1476
        %v1478 = vpop.xlane.xlu0 %1477
        %v1479 = vadd.f32 %v1411, %v1412
        %1480 = vadd.xlane.f32.xlu0 %v1479
        %v1481 = vpop.xlane.xlu0 %1480
        %v1482 = vadd.f32 %v1413, %v1414
        %1483 = vadd.xlane.f32.xlu0 %v1482
        %v1484 = vpop.xlane.xlu0 %1483
        %v1485 = vadd.f32 %v1415, %v1416
        %1486 = vadd.xlane.f32.xlu0 %v1485
        %v1487 = vpop.xlane.xlu0 %1486
        %v1488 = vadd.f32 %v1417, %v1418
        %1489 = vadd.xlane.f32.xlu0 %v1488
        %v1490 = vpop.xlane.xlu0 %1489
        %v1491 = vadd.f32 %v1419, %v1420
        %1492 = vadd.xlane.f32.xlu0 %v1491
        %v1493 = vpop.xlane.xlu0 %1492
        %v1494 = vadd.f32 %v1421, %v1422
        %1495 = vadd.xlane.f32.xlu0 %v1494
        %v1496 = vpop.xlane.xlu0 %1495
        %v1497 = vadd.f32 %v1423, %v1424
        %1498 = vadd.xlane.f32.xlu0 %v1497
        %v1499 = vpop.xlane.xlu0 %1498
        %v1500 = vadd.f32 %v1425, %v1426
        %1501 = vadd.xlane.f32.xlu0 %v1500
        %v1502 = vpop.xlane.xlu0 %1501
        %v1503 = vadd.f32 %v1427, %v1428
        %1504 = vadd.xlane.f32.xlu0 %v1503
        %v1505 = vpop.xlane.xlu0 %1504
        %v1506 = vadd.f32 %v1429, %v1430
        %1507 = vadd.xlane.f32.xlu0 %v1506
        %v1508 = vpop.xlane.xlu0 %1507
        %v1509 = vadd.f32 %v1431, %v1432
        %1510 = vadd.xlane.f32.xlu0 %v1509
        %v1511 = vpop.xlane.xlu0 %1510
        %v1512 = vadd.f32 %v1433, %v1434
        %1513 = vadd.xlane.f32.xlu0 %v1512
        %v1514 = vpop.xlane.xlu0 %1513
        %v1515 = vadd.f32 %v1435, %v1436
        %1516 = vadd.xlane.f32.xlu0 %v1515
        %v1517 = vpop.xlane.xlu0 %1516
        %v1518 = vadd.f32 %v1437, %v1438
        %1519 = vadd.xlane.f32.xlu0 %v1518
        %v1520 = vpop.xlane.xlu0 %1519
        %v1521 = vadd.f32 %v1439, %v1440
        %1522 = vadd.xlane.f32.xlu0 %v1521
        %v1523 = vpop.xlane.xlu0 %1522
        %v1524 = vadd.f32 %v1441, %v1442
        %1525 = vadd.xlane.f32.xlu0 %v1524
        %v1526 = vpop.xlane.xlu0 %1525
        %v1527 = vadd.f32 %v1443, %v1444
        %1528 = vadd.xlane.f32.xlu0 %v1527
        %v1529 = vpop.xlane.xlu0 %1528
        %v1530 = vadd.f32 %v1445, %v1446
        %1531 = vadd.xlane.f32.xlu0 %v1530
        %v1532 = vpop.xlane.xlu0 %1531
        %v1533 = vadd.f32 %v1447, %v1448
        %1534 = vadd.xlane.f32.xlu0 %v1533
        %v1535 = vpop.xlane.xlu0 %1534
        %v1536 = vadd.f32 %v1449, %v1450
        %1537 = vadd.xlane.f32.xlu0 %v1536
        %v1538 = vpop.xlane.xlu0 %1537
        %v1539 = vadd.f32 %v1451, %v1452
        %1540 = vadd.xlane.f32.xlu0 %v1539
        %v1541 = vpop.xlane.xlu0 %1540
        %v1542 = vadd.f32 %v1453, %v1454
        %1543 = vadd.xlane.f32.xlu0 %v1542
        %v1544 = vpop.xlane.xlu0 %1543
        %v1545 = vadd.f32 %v1455, %v1456
        %1546 = vadd.xlane.f32.xlu0 %v1545
        %v1547 = vpop.xlane.xlu0 %1546
        %v1548 = vadd.f32 %v1457, %v1458
        %1549 = vadd.xlane.f32.xlu0 %v1548
        %v1550 = vpop.xlane.xlu0 %1549
        %v1551 = vadd.f32 %v1459, %v1460
        %1552 = vadd.xlane.f32.xlu0 %v1551
        %v1553 = vpop.xlane.xlu0 %1552
        %v1554 = vadd.f32 %v1461, %v1462
        %1555 = vadd.xlane.f32.xlu0 %v1554
        %v1556 = vpop.xlane.xlu0 %1555
        %v1557 = vadd.f32 %v1463, %v1464
        %1558 = vadd.xlane.f32.xlu0 %v1557
        %v1559 = vpop.xlane.xlu0 %1558
        %v1560 = vadd.f32 %v1465, %v1466
        %1561 = vadd.xlane.f32.xlu0 %v1560
        %v1562 = vpop.xlane.xlu0 %1561
        %s1563 = sld [smem:[#allocation2]]
        %v1564 = vstv %s1563
        %v1565 = vadd.f32 %v1469, %v1564
        %v1566 = vadd.f32 %v1472, %v1564
        %v1567 = vadd.f32 %v1475, %v1564
        %v1568 = vadd.f32 %v1478, %v1564
        %v1569 = vadd.f32 %v1481, %v1564
        %v1570 = vadd.f32 %v1484, %v1564
        %v1571 = vadd.f32 %v1487, %v1564
        %v1572 = vadd.f32 %v1490, %v1564
        %v1573 = vadd.f32 %v1493, %v1564
        %v1574 = vadd.f32 %v1496, %v1564
        %v1575 = vadd.f32 %v1499, %v1564
        %v1576 = vadd.f32 %v1502, %v1564
        %v1577 = vadd.f32 %v1505, %v1564
        %v1578 = vadd.f32 %v1508, %v1564
        %v1579 = vadd.f32 %v1511, %v1564
        %v1580 = vadd.f32 %v1514, %v1564
        %v1581 = vadd.f32 %v1517, %v1564
        %v1582 = vadd.f32 %v1520, %v1564
        %v1583 = vadd.f32 %v1523, %v1564
        %v1584 = vadd.f32 %v1526, %v1564
        %v1585 = vadd.f32 %v1529, %v1564
        %v1586 = vadd.f32 %v1532, %v1564
        %v1587 = vadd.f32 %v1535, %v1564
        %v1588 = vadd.f32 %v1538, %v1564
        %v1589 = vadd.f32 %v1541, %v1564
        %v1590 = vadd.f32 %v1544, %v1564
        %v1591 = vadd.f32 %v1547, %v1564
        %v1592 = vadd.f32 %v1550, %v1564
        %v1593 = vadd.f32 %v1553, %v1564
        %v1594 = vadd.f32 %v1556, %v1564
        %v1595 = vadd.f32 %v1559, %v1564
        %v1596 = vadd.f32 %v1562, %v1564
        %1597 = vst [vmem:[%s320] sm:$0xff] %v1565
        %1598 = vst [vmem:[%s320 + $0x8] sm:$0xff] %v1566
        %1599 = vst [vmem:[%s320 + $0x10] sm:$0xff] %v1567
        %1600 = vst [vmem:[%s320 + $0x18] sm:$0xff] %v1568
        %1601 = vst [vmem:[%s320 + $0x20] sm:$0xff] %v1569
        %1602 = vst [vmem:[%s320 + $0x28] sm:$0xff] %v1570
        %1603 = vst [vmem:[%s320 + $0x30] sm:$0xff] %v1571
        %1604 = vst [vmem:[%s320 + $0x38] sm:$0xff] %v1572
        %1605 = vst [vmem:[%s320 + $0x40] sm:$0xff] %v1573
        %1606 = vst [vmem:[%s320 + $0x48] sm:$0xff] %v1574
        %1607 = vst [vmem:[%s320 + $0x50] sm:$0xff] %v1575
        %1608 = vst [vmem:[%s320 + $0x58] sm:$0xff] %v1576
        %1609 = vst [vmem:[%s320 + $0x60] sm:$0xff] %v1577
        %1610 = vst [vmem:[%s320 + $0x68] sm:$0xff] %v1578
        %1611 = vst [vmem:[%s320 + $0x70] sm:$0xff] %v1579
        %1612 = vst [vmem:[%s320 + $0x78] sm:$0xff] %v1580
        %1613 = vst [vmem:[%s320 + $0x80] sm:$0xff] %v1581
        %1614 = vst [vmem:[%s320 + $0x88] sm:$0xff] %v1582
        %1615 = vst [vmem:[%s320 + $0x90] sm:$0xff] %v1583
        %1616 = vst [vmem:[%s320 + $0x98] sm:$0xff] %v1584
        %1617 = vst [vmem:[%s320 + $0xa0] sm:$0xff] %v1585
        %1618 = vst [vmem:[%s320 + $0xa8] sm:$0xff] %v1586
        %1619 = vst [vmem:[%s320 + $0xb0] sm:$0xff] %v1587
        %1620 = vst [vmem:[%s320 + $0xb8] sm:$0xff] %v1588
        %1621 = vst [vmem:[%s320 + $0xc0] sm:$0xff] %v1589
        %1622 = vst [vmem:[%s320 + $0xc8] sm:$0xff] %v1590
        %1623 = vst [vmem:[%s320 + $0xd0] sm:$0xff] %v1591
        %1624 = vst [vmem:[%s320 + $0xd8] sm:$0xff] %v1592
        %1625 = vst [vmem:[%s320 + $0xe0] sm:$0xff] %v1593
        %1626 = vst [vmem:[%s320 + $0xe8] sm:$0xff] %v1594
        %1627 = vst [vmem:[%s320 + $0xf0] sm:$0xff] %v1595
        %1628 = vst [vmem:[%s320 + $0xf8] sm:$0xff] %v1596
        %s1629 = sand.u32 %s192, 1
        %s1630 = scalar_lea.sflag [#allocation4], %s1629
        %s1631 = sand.u32 %s192, 1
        %s1632 = smul.addr %s1631, 256
        %s1633 = scalar_lea.vmem [#allocation3], %s1632
        %s1634 = sand.u32 %s218, 1
        %s1635 = scalar_lea.sflag [#allocation6], %s1634
        %s1636 = sand.u32 %s218, 1
        %s1637 = smul.addr %s1636, 512
        %s1638 = scalar_lea.vmem [#allocation5], %s1637
        // Predicated region
        $region49: #{tpu_custom_call.1} parent=47 // pred_check
          %p1639 = pneg %p202
        $region50: #{tpu_custom_call.1} parent=47 // pred_check_branch
          %1641 = sbr.rel (%p1639) target = $region52
        $region51: #{tpu_custom_call.1} parent=47 // pred_region
          %s1642 = smul.u32 32, %s27
          %s1644 = ssub.s32 4096, 4096
          %1645 = vsyncadd %s1630, %s1644
          %s1646 = smul.addr %s1642, 128
          %s1647 = scalar_lea.hbm %s7, %s1646
          %s1648 = sshll.u32 %s1633, 4
          %s1649 = int_to_ptr.vmem [resolvable:$true] %s1648
          %1654 = dma.vmem_to_hbm [thread:$0]  %s1649, 4096, %s1647, %s1630, 128, 128, 8
        $region52: #{tpu_custom_call.1} parent=47 // pred_fallthru
          _
        // Predicated region
        $region53: #{tpu_custom_call.1} parent=47 // pred_check
          %p1655 = pneg %p228
        $region54: #{tpu_custom_call.1} parent=47 // pred_check_branch
          %1657 = sbr.rel (%p1655) target = $region56
        $region55: #{tpu_custom_call.1} parent=47 // pred_region
          %s1658 = smul.u32 32, %s27
          %s1660 = ssub.s32 8192, 8192
          %1661 = vsyncadd %s1635, %s1660
          %s1662 = smul.addr %s1658, 2
          %s1663 = smul.addr %s1662, 128
          %s1664 = scalar_lea.hbm %s8, %s1663
          %s1665 = sshll.u32 %s1638, 4
          %s1666 = int_to_ptr.vmem [resolvable:$true] %s1665
          %1671 = dma.vmem_to_hbm [thread:$0]  %s1666, 8192, %s1664, %s1635, 256, 256, 16
        $region56: #{tpu_custom_call.1} parent=47 // pred_fallthru
          _
      $region48: #{tpu_custom_call.1} parent=5 // pred_fallthru
        _
      %p1672 = scmp.le.s32.totalorder 2, %s22
      // Predicated region
      $region57: #{tpu_custom_call.1} parent=5 // pred_check
        %p1673 = pneg %p1672
      $region58: #{tpu_custom_call.1} parent=5 // pred_check_branch
        %1675 = sbr.rel (%p1673) target = $region60
      $region59: #{tpu_custom_call.1} parent=5 // pred_region
        %s1676 = ssub.s32 %s22, 2
        // Predicated region
        $region61: #{tpu_custom_call.1} parent=59 // pred_check
          %p1677 = pneg %p208
        $region62: #{tpu_custom_call.1} parent=59 // pred_check_branch
          %1679 = sbr.rel (%p1677) target = $region64
        $region63: #{tpu_custom_call.1} parent=59 // pred_region
          %s1680 = sand.u32 %s193, 1
          %s1681 = scalar_lea.sflag [#allocation4], %s1680
          %s1682 = sand.u32 %s193, 1
          %s1683 = smul.addr %s1682, 256
          %s1684 = scalar_lea.vmem [#allocation3], %s1683
          %1685 = dma.done %s1681, 4096
        $region64: #{tpu_custom_call.1} parent=59 // pred_fallthru
          _
        // Predicated region
        $region65: #{tpu_custom_call.1} parent=59 // pred_check
          %p1686 = pneg %p234
        $region66: #{tpu_custom_call.1} parent=59 // pred_check_branch
          %1688 = sbr.rel (%p1686) target = $region68
        $region67: #{tpu_custom_call.1} parent=59 // pred_region
          %s1689 = sand.u32 %s219, 1
          %s1690 = scalar_lea.sflag [#allocation6], %s1689
          %s1691 = sand.u32 %s219, 1
          %s1692 = smul.addr %s1691, 512
          %s1693 = scalar_lea.vmem [#allocation5], %s1692
          %1694 = dma.done %s1690, 8192
        $region68: #{tpu_custom_call.1} parent=59 // pred_fallthru
          _
      $region60: #{tpu_custom_call.1} parent=5 // pred_fallthru
        _
    $region6: #{tpu_custom_call.1} parent=1 // loop_footer
      %s26 = sadd.s32 1, %s22
    $region7: #{tpu_custom_call.1} parent=1 // loop_footer_branch
      %21 = sbr.rel target = $region3
    $region8: #{tpu_custom_call.1} parent=1 // loop_exit
      _
    %1695 = vsyncpa [#allocation4], 1
    %s1696 = scalar_lea.sflag [#allocation4], 1
    %1697 = vsyncpa %s1696, 1
    %1698 = vsyncpa [#allocation6], 1
    %s1699 = scalar_lea.sflag [#allocation6], 1
    %1700 = vsyncpa %s1699, 1

</llo_original>
